<compile_context>
chip_gen: v5e
topology: v5e:2x2
jax: 0.10.0
libtpu: 0.0.40
codegen_flags: <defaults>
</compile_context>

<pallas_src>
import functools

import jax
import jax.numpy as jnp
from jax.experimental import pallas as pl
from jax.experimental.pallas import tpu as pltpu

K = 7          # effective (fused) depthwise kernel size
PAD = K // 2   # 3


def _ppeg_kernel(x_ref, w_ref, b_ref, o_ref, xpad_ref, *, H, W, h_chunk):
    """Fused depthwise 7x7 conv + cls passthrough on a (1, 1+H*W, tc) block.

    x_ref   : (1, 1+H*W, tc)  input sequence block (VMEM)
    w_ref   : (49, tc)        fused per-channel taps, row index = ky*7+kx
    b_ref   : (1, tc)         fused per-channel bias
    o_ref   : (1, 1+H*W, tc)  output sequence block
    xpad_ref: (H+6, W+6, tc)  zero-padded image scratch (VMEM, f32)
    """
    tc = x_ref.shape[-1]
    HW = H * W
    Wp = W + 2 * PAD

    # cls-token row passes straight through (fused concat).
    o_ref[0, pl.ds(0, 1), :] = x_ref[0, pl.ds(0, 1), :]

    # Zero only the 3-wide halo bands; the interior is fully overwritten below.
    xpad_ref[pl.ds(0, PAD), :, :] = jnp.zeros((PAD, Wp, tc), jnp.float32)
    xpad_ref[pl.ds(H + PAD, PAD), :, :] = jnp.zeros((PAD, Wp, tc), jnp.float32)
    xpad_ref[pl.ds(PAD, H), pl.ds(0, PAD), :] = jnp.zeros((H, PAD, tc),
                                                          jnp.float32)
    xpad_ref[pl.ds(PAD, H), pl.ds(W + PAD, PAD), :] = jnp.zeros((H, PAD, tc),
                                                                jnp.float32)

    # Scatter the feature rows into the interior of the padded tile.
    feat = x_ref[0, pl.ds(1, HW), :].astype(jnp.float32)
    xpad_ref[pl.ds(PAD, H), pl.ds(PAD, W), :] = feat.reshape(H, W, tc)

    bias = b_ref[0, :]                                        # (tc,) f32

    def mac_chunk(h0):
        # Accumulator bounded to h_chunk rows; initialized with the bias
        # (saves a full VALU add pass at the epilogue).
        acc = jnp.broadcast_to(bias.reshape(1, 1, tc), (h_chunk, W, tc))
        for kx in range(K):
            # One sublane(W)-shifted slab per kx ...
            slab = xpad_ref[pl.ds(h0, h_chunk + 2 * PAD), pl.ds(kx, W), :]
            for ky in range(K):
                # ... and 7 free leading-axis (H) selects of that value.
                acc = acc + slab[ky:ky + h_chunk] * w_ref[ky * K + kx, :]
        o_ref[0, pl.ds(1 + h0 * W, h_chunk * W), :] = (
            acc.reshape(h_chunk * W, tc).astype(o_ref.dtype))

    n_chunks = H // h_chunk
    if n_chunks == 1:
        mac_chunk(0)
    else:
        @pl.loop(0, n_chunks)
        def _(ci):
            mac_chunk(pl.multiple_of(ci * h_chunk, h_chunk))


def _choose_channel_tile(C):
    # Vreg-pressure cap: 128 lanes per block keeps the f32 accumulator +
    # shifted slab comfortably inside the 64-vreg file; larger tc (512/1024)
    # would spill and turn the kernel ld/st-bound.
    if C % 128 == 0:
        return 128
    return C  # small / odd C: block must equal the full dim


def _choose_h_chunk(H, W, tc):
    # Keep the per-chunk accumulator <= ~16 f32 vregs (16 * 8 * 128 elems).
    cap = max(1, (16 * 8 * 128) // max(1, W * tc))
    h = min(H, cap)
    while H % h != 0:          # largest divisor of H not exceeding the cap
        h -= 1
    return h


def _vmem_need(N, tc, H, W, itemsize):
    Hp, Wp = H + 2 * PAD, W + 2 * PAD
    io = N * tc * itemsize                 # one (1, N, tc) in/out block
    weights = (K * K + 1) * tc * 4
    scratch = Hp * Wp * tc * 4
    return 2 * 2 * io + 2 * weights + scratch   # x2 double-buffering on I/O


def fused_ppeg_conv(x, H, W, w_eff, b_eff):
    """x: (B, 1+H*W, C); w_eff: (49, C) fused taps; b_eff: (C,) fused bias."""
    B, N, C = x.shape
    Hp, Wp = H + 2 * PAD, W + 2 * PAD
    tc = _choose_channel_tile(C)
    h_chunk = _choose_h_chunk(H, W, tc)
    need = _vmem_need(N, tc, H, W, jnp.dtype(x.dtype).itemsize)

    # Generation-aware VMEM ceiling: ~48 MiB on v7x (64 MiB physical),
    # up to 64 MiB on v5e/v6e (128 MiB physical).
    try:
        phys = getattr(pltpu.get_tpu_info(), "vmem_capacity_bytes", 128 << 20)
    except Exception:
        phys = 128 << 20
    cap = min((phys * 3) // 4, 64 << 20)
    vmem_limit = int(min(cap, max(32 << 20, 2 * need)))

    kernel = functools.partial(_ppeg_kernel, H=H, W=W, h_chunk=h_chunk)
    # Channel axis outermost: weight/bias block indices are constant across
    # the fast-moving batch axis (no re-fetch). Both axes are independent
    # ("parallel") so v7x can shard them across its two TensorCores.
    grid = (C // tc, B)

    return pl.pallas_call(
        kernel,
        out_shape=jax.ShapeDtypeStruct((B, N, C), x.dtype),
        grid_spec=pltpu.PrefetchScalarGridSpec(
            num_scalar_prefetch=0,
            grid=grid,
            in_specs=[
                pl.BlockSpec((1, N, tc), lambda c, b: (b, 0, c)),
                pl.BlockSpec((K * K, tc), lambda c, b: (0, c)),
                pl.BlockSpec((1, tc), lambda c, b: (0, c)),
            ],
            out_specs=pl.BlockSpec((1, N, tc), lambda c, b: (b, 0, c)),
            scratch_shapes=[pltpu.VMEM((Hp, Wp, tc), jnp.float32)],
        ),
        compiler_params=pltpu.CompilerParams(
            dimension_semantics=("parallel", "parallel"),
            vmem_limit_bytes=vmem_limit,
        ),
    )(x, w_eff.astype(jnp.float32), b_eff.reshape(1, C).astype(jnp.float32))


def make_ppeg_params(dim, key):
    """Deterministic init of the three depthwise conv weights/biases.

    PyTorch shapes: proj.weight  (dim, 1, 7, 7), proj.bias  (dim,)
                    proj1.weight (dim, 1, 5, 5), proj1.bias (dim,)
                    proj2.weight (dim, 1, 3, 3), proj2.bias (dim,)
    """
    ks = jax.random.split(key, 6)
    w7 = jax.random.normal(ks[0], (dim, 1, 7, 7), jnp.float32) * 0.05
    b7 = jax.random.normal(ks[1], (dim,), jnp.float32) * 0.05
    w5 = jax.random.normal(ks[2], (dim, 1, 5, 5), jnp.float32) * 0.05
    b5 = jax.random.normal(ks[3], (dim,), jnp.float32) * 0.05
    w3 = jax.random.normal(ks[4], (dim, 1, 3, 3), jnp.float32) * 0.05
    b3 = jax.random.normal(ks[5], (dim,), jnp.float32) * 0.05
    return (w7, b7), (w5, b5), (w3, b3)


def fuse_params(params):
    """Fold the three depthwise kernels + identity into one flat (49, C) kernel."""
    (w7, b7), (w5, b5), (w3, b3) = params
    C = w7.shape[0]
    w7_t = jnp.transpose(w7[:, 0, :, :], (1, 2, 0))   # (7,7,C)
    w5_t = jnp.transpose(w5[:, 0, :, :], (1, 2, 0))   # (5,5,C)
    w3_t = jnp.transpose(w3[:, 0, :, :], (1, 2, 0))   # (3,3,C)

    w_eff = w7_t
    w_eff = w_eff.at[1:6, 1:6, :].add(w5_t)   # 5x5 centered inside 7x7
    w_eff = w_eff.at[2:5, 2:5, :].add(w3_t)   # 3x3 centered inside 7x7
    w_eff = w_eff.at[3, 3, :].add(1.0)        # identity (+ cnn_feat) term
    b_eff = b7 + b5 + b3
    return w_eff.reshape(K * K, C), b_eff


def ppeg_forward(x, H, W, params):
    """x: (B, N, C) with N = 1 + H*W.  Returns (B, N, C)."""
    B, N, C = x.shape
    assert N == 1 + H * W, "PPEG expects x of shape (B, 1 + H*W, C)"
    w_eff, b_eff = fuse_params(params)
    return fused_ppeg_conv(x, H, W, w_eff, b_eff)


def ppeg_reference(x, H, W, params):
    """Pure-JAX reference mirroring the PyTorch forward (NCHW convs)."""
    (w7, b7), (w5, b5), (w3, b3) = params
    B, N, C = x.shape
    cls_token = x[:, 0:1, :]
    feat = x[:, 1:, :]
    cnn = jnp.transpose(feat, (0, 2, 1)).reshape(B, C, H, W)  # NCHW

    def dwconv(inp, w, b, k):
        out = jax.lax.conv_general_dilated(
            inp, w, window_strides=(1, 1), padding=[(k // 2, k // 2)] * 2,
            dimension_numbers=("NCHW", "OIHW", "NCHW"),
            feature_group_count=C)
        return out + b.reshape(1, C, 1, 1)

    y = (dwconv(cnn, w7, b7, 7) + cnn +
         dwconv(cnn, w5, b5, 5) + dwconv(cnn, w3, b3, 3))
    y = y.reshape(B, C, H * W).transpose(0, 2, 1)
    return jnp.concatenate([cls_token, y], axis=1)


if __name__ == "__main__":
    B, C, H, W = 2, 128, 8, 8
    N = 1 + H * W

    key = jax.random.PRNGKey(0)
    k_x, k_p = jax.random.split(key)
    x = jax.random.normal(k_x, (B, N, C), jnp.float32)
    params = make_ppeg_params(C, k_p)

    out = jax.block_until_ready(ppeg_forward(x, H, W, params))
    ref = jax.block_until_ready(ppeg_reference(x, H, W, params))

    assert out.shape == (B, N, C)
    assert float(jnp.max(jnp.abs(out - ref))) < 1e-4

    print("KERNEL_OK")
</pallas_src>

<mosaic_0001>
module attributes {stable_mosaic.version = 11 : i64} {
  func.func @_ppeg_kernel(%arg0: i32, %arg1: i32, %arg2: memref<1x65x128xf32, #tpu.memory_space<vmem>>, %arg3: memref<49x128xf32, #tpu.memory_space<vmem>>, %arg4: memref<1x128xf32, #tpu.memory_space<vmem>>, %arg5: memref<1x65x128xf32, #tpu.memory_space<vmem>>, %arg6: memref<14x14x128xf32, #tpu.memory_space<vmem>>) attributes {dimension_semantics = [#tpu.dimension_semantics<parallel>, #tpu.dimension_semantics<parallel>], iteration_bounds = array<i64: 1, 2>, scalar_prefetch = 0 : i64, scratch_operands = 1 : i64, tpu.core_type = #tpu.core_type<tc>, window_params = [{transform_indices = @transform_0, window_bounds = array<i64: 1, 65, 128>}, {transform_indices = @transform_1, window_bounds = array<i64: 49, 128>}, {transform_indices = @transform_2, window_bounds = array<i64: 1, 128>}, {transform_indices = @transform_3, window_bounds = array<i64: 1, 65, 128>}]} {
    %c0 = arith.constant 0 : index
    %c0_0 = arith.constant 0 : index
    %c0_1 = arith.constant 0 : index
    %0 = vector.load %arg2[%c0, %c0_0, %c0_1] : memref<1x65x128xf32, #tpu.memory_space<vmem>>, vector<1x1x128xf32>
    %1 = vector.shape_cast %0 : vector<1x1x128xf32> to vector<1x128xf32>
    %c0_2 = arith.constant 0 : index
    %c0_3 = arith.constant 0 : index
    %c0_4 = arith.constant 0 : index
    %2 = vector.load %arg5[%c0_2, %c0_3, %c0_4] : memref<1x65x128xf32, #tpu.memory_space<vmem>>, vector<1x1x128xf32>
    %3 = vector.shape_cast %2 : vector<1x1x128xf32> to vector<1x128xf32>
    %4 = vector.shape_cast %1 : vector<1x128xf32> to vector<1x1x128xf32>
    tpu.vector_store %arg5[%c0_2, %c0_3, %c0_4], %4 {strides = array<i32>} : memref<1x65x128xf32, #tpu.memory_space<vmem>>, vector<1x1x128xf32>,
    %cst = arith.constant 0.000000e+00 : f32
    %5 = vector.broadcast %cst : f32 to vector<3x14x128xf32>
    %c0_5 = arith.constant 0 : index
    %c0_6 = arith.constant 0 : index
    %c0_7 = arith.constant 0 : index
    %6 = vector.load %arg6[%c0_5, %c0_6, %c0_7] : memref<14x14x128xf32, #tpu.memory_space<vmem>>, vector<3x14x128xf32>
    tpu.vector_store %arg6[%c0_5, %c0_6, %c0_7], %5 {strides = array<i32>} : memref<14x14x128xf32, #tpu.memory_space<vmem>>, vector<3x14x128xf32>,
    %cst_8 = arith.constant 0.000000e+00 : f32
    %7 = vector.broadcast %cst_8 : f32 to vector<3x14x128xf32>
    %c11 = arith.constant 11 : index
    %c0_9 = arith.constant 0 : index
    %c0_10 = arith.constant 0 : index
    %8 = vector.load %arg6[%c11, %c0_9, %c0_10] : memref<14x14x128xf32, #tpu.memory_space<vmem>>, vector<3x14x128xf32>
    tpu.vector_store %arg6[%c11, %c0_9, %c0_10], %7 {strides = array<i32>} : memref<14x14x128xf32, #tpu.memory_space<vmem>>, vector<3x14x128xf32>,
    %cst_11 = arith.constant 0.000000e+00 : f32
    %9 = vector.broadcast %cst_11 : f32 to vector<8x3x128xf32>
    %c3 = arith.constant 3 : index
    %c0_12 = arith.constant 0 : index
    %c0_13 = arith.constant 0 : index
    %10 = vector.load %arg6[%c3, %c0_12, %c0_13] : memref<14x14x128xf32, #tpu.memory_space<vmem>>, vector<8x3x128xf32>
    tpu.vector_store %arg6[%c3, %c0_12, %c0_13], %9 {strides = array<i32>} : memref<14x14x128xf32, #tpu.memory_space<vmem>>, vector<8x3x128xf32>,
    %cst_14 = arith.constant 0.000000e+00 : f32
    %11 = vector.broadcast %cst_14 : f32 to vector<8x3x128xf32>
    %c3_15 = arith.constant 3 : index
    %c11_16 = arith.constant 11 : index
    %c0_17 = arith.constant 0 : index
    %12 = vector.load %arg6[%c3_15, %c11_16, %c0_17] : memref<14x14x128xf32, #tpu.memory_space<vmem>>, vector<8x3x128xf32>
    tpu.vector_store %arg6[%c3_15, %c11_16, %c0_17], %11 {strides = array<i32>} : memref<14x14x128xf32, #tpu.memory_space<vmem>>, vector<8x3x128xf32>,
    %c0_18 = arith.constant 0 : index
    %c1 = arith.constant 1 : index
    %c0_19 = arith.constant 0 : index
    %13 = vector.load %arg2[%c0_18, %c1, %c0_19] : memref<1x65x128xf32, #tpu.memory_space<vmem>>, vector<1x64x128xf32>
    %14 = vector.shape_cast %13 : vector<1x64x128xf32> to vector<64x128xf32>
    %15 = vector.shape_cast %14 : vector<64x128xf32> to vector<8x8x128xf32>
    %c3_20 = arith.constant 3 : index
    %c3_21 = arith.constant 3 : index
    %c0_22 = arith.constant 0 : index
    %16 = vector.load %arg6[%c3_20, %c3_21, %c0_22] : memref<14x14x128xf32, #tpu.memory_space<vmem>>, vector<8x8x128xf32>
    tpu.vector_store %arg6[%c3_20, %c3_21, %c0_22], %15 {strides = array<i32>} : memref<14x14x128xf32, #tpu.memory_space<vmem>>, vector<8x8x128xf32>,
    %c0_23 = arith.constant 0 : index
    %c0_24 = arith.constant 0 : index
    %17 = vector.load %arg4[%c0_23, %c0_24] : memref<1x128xf32, #tpu.memory_space<vmem>>, vector<1x128xf32>
    %18 = vector.shape_cast %17 : vector<1x128xf32> to vector<128xf32>
    %19 = vector.shape_cast %18 : vector<128xf32> to vector<1x1x128xf32>
    %20 = vector.shape_cast %19 : vector<1x1x128xf32> to vector<1x1x128xf32>
    %21 = vector.broadcast %20 : vector<1x1x128xf32> to vector<8x8x128xf32>
    %c0_25 = arith.constant 0 : index
    %c0_26 = arith.constant 0 : index
    %c0_27 = arith.constant 0 : index
    %22 = vector.load %arg6[%c0_25, %c0_26, %c0_27] : memref<14x14x128xf32, #tpu.memory_space<vmem>>, vector<14x8x128xf32>
    %23 = vector.extract_strided_slice %22 {offsets = [0, 0, 0], sizes = [8, 8, 128], strides = [1, 1, 1]} : vector<14x8x128xf32> to vector<8x8x128xf32>
    %c0_28 = arith.constant 0 : index
    %c0_29 = arith.constant 0 : index
    %24 = vector.load %arg3[%c0_28, %c0_29] : memref<49x128xf32, #tpu.memory_space<vmem>>, vector<1x128xf32>
    %25 = vector.shape_cast %24 : vector<1x128xf32> to vector<128xf32>
    %26 = vector.shape_cast %25 : vector<128xf32> to vector<1x1x128xf32>
    %27 = vector.broadcast %26 : vector<1x1x128xf32> to vector<8x8x128xf32>
    %28 = arith.mulf %23, %27 : vector<8x8x128xf32>
    %29 = arith.addf %21, %28 : vector<8x8x128xf32>
    %30 = vector.extract_strided_slice %22 {offsets = [1, 0, 0], sizes = [8, 8, 128], strides = [1, 1, 1]} : vector<14x8x128xf32> to vector<8x8x128xf32>
    %c7 = arith.constant 7 : index
    %c0_30 = arith.constant 0 : index
    %31 = vector.load %arg3[%c7, %c0_30] : memref<49x128xf32, #tpu.memory_space<vmem>>, vector<1x128xf32>
    %32 = vector.shape_cast %31 : vector<1x128xf32> to vector<128xf32>
    %33 = vector.shape_cast %32 : vector<128xf32> to vector<1x1x128xf32>
    %34 = vector.broadcast %33 : vector<1x1x128xf32> to vector<8x8x128xf32>
    %35 = arith.mulf %30, %34 : vector<8x8x128xf32>
    %36 = arith.addf %29, %35 : vector<8x8x128xf32>
    %37 = vector.extract_strided_slice %22 {offsets = [2, 0, 0], sizes = [8, 8, 128], strides = [1, 1, 1]} : vector<14x8x128xf32> to vector<8x8x128xf32>
    %c14 = arith.constant 14 : index
    %c0_31 = arith.constant 0 : index
    %38 = vector.load %arg3[%c14, %c0_31] : memref<49x128xf32, #tpu.memory_space<vmem>>, vector<1x128xf32>
    %39 = vector.shape_cast %38 : vector<1x128xf32> to vector<128xf32>
    %40 = vector.shape_cast %39 : vector<128xf32> to vector<1x1x128xf32>
    %41 = vector.broadcast %40 : vector<1x1x128xf32> to vector<8x8x128xf32>
    %42 = arith.mulf %37, %41 : vector<8x8x128xf32>
    %43 = arith.addf %36, %42 : vector<8x8x128xf32>
    %44 = vector.extract_strided_slice %22 {offsets = [3, 0, 0], sizes = [8, 8, 128], strides = [1, 1, 1]} : vector<14x8x128xf32> to vector<8x8x128xf32>
    %c21 = arith.constant 21 : index
    %c0_32 = arith.constant 0 : index
    %45 = vector.load %arg3[%c21, %c0_32] : memref<49x128xf32, #tpu.memory_space<vmem>>, vector<1x128xf32>
    %46 = vector.shape_cast %45 : vector<1x128xf32> to vector<128xf32>
    %47 = vector.shape_cast %46 : vector<128xf32> to vector<1x1x128xf32>
    %48 = vector.broadcast %47 : vector<1x1x128xf32> to vector<8x8x128xf32>
    %49 = arith.mulf %44, %48 : vector<8x8x128xf32>
    %50 = arith.addf %43, %49 : vector<8x8x128xf32>
    %51 = vector.extract_strided_slice %22 {offsets = [4, 0, 0], sizes = [8, 8, 128], strides = [1, 1, 1]} : vector<14x8x128xf32> to vector<8x8x128xf32>
    %c28 = arith.constant 28 : index
    %c0_33 = arith.constant 0 : index
    %52 = vector.load %arg3[%c28, %c0_33] : memref<49x128xf32, #tpu.memory_space<vmem>>, vector<1x128xf32>
    %53 = vector.shape_cast %52 : vector<1x128xf32> to vector<128xf32>
    %54 = vector.shape_cast %53 : vector<128xf32> to vector<1x1x128xf32>
    %55 = vector.broadcast %54 : vector<1x1x128xf32> to vector<8x8x128xf32>
    %56 = arith.mulf %51, %55 : vector<8x8x128xf32>
    %57 = arith.addf %50, %56 : vector<8x8x128xf32>
    %58 = vector.extract_strided_slice %22 {offsets = [5, 0, 0], sizes = [8, 8, 128], strides = [1, 1, 1]} : vector<14x8x128xf32> to vector<8x8x128xf32>
    %c35 = arith.constant 35 : index
    %c0_34 = arith.constant 0 : index
    %59 = vector.load %arg3[%c35, %c0_34] : memref<49x128xf32, #tpu.memory_space<vmem>>, vector<1x128xf32>
    %60 = vector.shape_cast %59 : vector<1x128xf32> to vector<128xf32>
    %61 = vector.shape_cast %60 : vector<128xf32> to vector<1x1x128xf32>
    %62 = vector.broadcast %61 : vector<1x1x128xf32> to vector<8x8x128xf32>
    %63 = arith.mulf %58, %62 : vector<8x8x128xf32>
    %64 = arith.addf %57, %63 : vector<8x8x128xf32>
    %65 = vector.extract_strided_slice %22 {offsets = [6, 0, 0], sizes = [8, 8, 128], strides = [1, 1, 1]} : vector<14x8x128xf32> to vector<8x8x128xf32>
    %c42 = arith.constant 42 : index
    %c0_35 = arith.constant 0 : index
    %66 = vector.load %arg3[%c42, %c0_35] : memref<49x128xf32, #tpu.memory_space<vmem>>, vector<1x128xf32>
    %67 = vector.shape_cast %66 : vector<1x128xf32> to vector<128xf32>
    %68 = vector.shape_cast %67 : vector<128xf32> to vector<1x1x128xf32>
    %69 = vector.broadcast %68 : vector<1x1x128xf32> to vector<8x8x128xf32>
    %70 = arith.mulf %65, %69 : vector<8x8x128xf32>
    %71 = arith.addf %64, %70 : vector<8x8x128xf32>
    %c0_36 = arith.constant 0 : index
    %c1_37 = arith.constant 1 : index
    %c0_38 = arith.constant 0 : index
    %72 = vector.load %arg6[%c0_36, %c1_37, %c0_38] : memref<14x14x128xf32, #tpu.memory_space<vmem>>, vector<14x8x128xf32>
    %73 = vector.extract_strided_slice %72 {offsets = [0, 0, 0], sizes = [8, 8, 128], strides = [1, 1, 1]} : vector<14x8x128xf32> to vector<8x8x128xf32>
    %c1_39 = arith.constant 1 : index
    %c0_40 = arith.constant 0 : index
    %74 = vector.load %arg3[%c1_39, %c0_40] : memref<49x128xf32, #tpu.memory_space<vmem>>, vector<1x128xf32>
    %75 = vector.shape_cast %74 : vector<1x128xf32> to vector<128xf32>
    %76 = vector.shape_cast %75 : vector<128xf32> to vector<1x1x128xf32>
    %77 = vector.broadcast %76 : vector<1x1x128xf32> to vector<8x8x128xf32>
    %78 = arith.mulf %73, %77 : vector<8x8x128xf32>
    %79 = arith.addf %71, %78 : vector<8x8x128xf32>
    %80 = vector.extract_strided_slice %72 {offsets = [1, 0, 0], sizes = [8, 8, 128], strides = [1, 1, 1]} : vector<14x8x128xf32> to vector<8x8x128xf32>
    %c8 = arith.constant 8 : index
    %c0_41 = arith.constant 0 : index
    %81 = vector.load %arg3[%c8, %c0_41] : memref<49x128xf32, #tpu.memory_space<vmem>>, vector<1x128xf32>
    %82 = vector.shape_cast %81 : vector<1x128xf32> to vector<128xf32>
    %83 = vector.shape_cast %82 : vector<128xf32> to vector<1x1x128xf32>
    %84 = vector.broadcast %83 : vector<1x1x128xf32> to vector<8x8x128xf32>
    %85 = arith.mulf %80, %84 : vector<8x8x128xf32>
    %86 = arith.addf %79, %85 : vector<8x8x128xf32>
    %87 = vector.extract_strided_slice %72 {offsets = [2, 0, 0], sizes = [8, 8, 128], strides = [1, 1, 1]} : vector<14x8x128xf32> to vector<8x8x128xf32>
    %c15 = arith.constant 15 : index
    %c0_42 = arith.constant 0 : index
    %88 = vector.load %arg3[%c15, %c0_42] : memref<49x128xf32, #tpu.memory_space<vmem>>, vector<1x128xf32>
    %89 = vector.shape_cast %88 : vector<1x128xf32> to vector<128xf32>
    %90 = vector.shape_cast %89 : vector<128xf32> to vector<1x1x128xf32>
    %91 = vector.broadcast %90 : vector<1x1x128xf32> to vector<8x8x128xf32>
    %92 = arith.mulf %87, %91 : vector<8x8x128xf32>
    %93 = arith.addf %86, %92 : vector<8x8x128xf32>
    %94 = vector.extract_strided_slice %72 {offsets = [3, 0, 0], sizes = [8, 8, 128], strides = [1, 1, 1]} : vector<14x8x128xf32> to vector<8x8x128xf32>
    %c22 = arith.constant 22 : index
    %c0_43 = arith.constant 0 : index
    %95 = vector.load %arg3[%c22, %c0_43] : memref<49x128xf32, #tpu.memory_space<vmem>>, vector<1x128xf32>
    %96 = vector.shape_cast %95 : vector<1x128xf32> to vector<128xf32>
    %97 = vector.shape_cast %96 : vector<128xf32> to vector<1x1x128xf32>
    %98 = vector.broadcast %97 : vector<1x1x128xf32> to vector<8x8x128xf32>
    %99 = arith.mulf %94, %98 : vector<8x8x128xf32>
    %100 = arith.addf %93, %99 : vector<8x8x128xf32>
    %101 = vector.extract_strided_slice %72 {offsets = [4, 0, 0], sizes = [8, 8, 128], strides = [1, 1, 1]} : vector<14x8x128xf32> to vector<8x8x128xf32>
    %c29 = arith.constant 29 : index
    %c0_44 = arith.constant 0 : index
    %102 = vector.load %arg3[%c29, %c0_44] : memref<49x128xf32, #tpu.memory_space<vmem>>, vector<1x128xf32>
    %103 = vector.shape_cast %102 : vector<1x128xf32> to vector<128xf32>
    %104 = vector.shape_cast %103 : vector<128xf32> to vector<1x1x128xf32>
    %105 = vector.broadcast %104 : vector<1x1x128xf32> to vector<8x8x128xf32>
    %106 = arith.mulf %101, %105 : vector<8x8x128xf32>
    %107 = arith.addf %100, %106 : vector<8x8x128xf32>
    %108 = vector.extract_strided_slice %72 {offsets = [5, 0, 0], sizes = [8, 8, 128], strides = [1, 1, 1]} : vector<14x8x128xf32> to vector<8x8x128xf32>
    %c36 = arith.constant 36 : index
    %c0_45 = arith.constant 0 : index
    %109 = vector.load %arg3[%c36, %c0_45] : memref<49x128xf32, #tpu.memory_space<vmem>>, vector<1x128xf32>
    %110 = vector.shape_cast %109 : vector<1x128xf32> to vector<128xf32>
    %111 = vector.shape_cast %110 : vector<128xf32> to vector<1x1x128xf32>
    %112 = vector.broadcast %111 : vector<1x1x128xf32> to vector<8x8x128xf32>
    %113 = arith.mulf %108, %112 : vector<8x8x128xf32>
    %114 = arith.addf %107, %113 : vector<8x8x128xf32>
    %115 = vector.extract_strided_slice %72 {offsets = [6, 0, 0], sizes = [8, 8, 128], strides = [1, 1, 1]} : vector<14x8x128xf32> to vector<8x8x128xf32>
    %c43 = arith.constant 43 : index
    %c0_46 = arith.constant 0 : index
    %116 = vector.load %arg3[%c43, %c0_46] : memref<49x128xf32, #tpu.memory_space<vmem>>, vector<1x128xf32>
    %117 = vector.shape_cast %116 : vector<1x128xf32> to vector<128xf32>
    %118 = vector.shape_cast %117 : vector<128xf32> to vector<1x1x128xf32>
    %119 = vector.broadcast %118 : vector<1x1x128xf32> to vector<8x8x128xf32>
    %120 = arith.mulf %115, %119 : vector<8x8x128xf32>
    %121 = arith.addf %114, %120 : vector<8x8x128xf32>
    %c0_47 = arith.constant 0 : index
    %c2 = arith.constant 2 : index
    %c0_48 = arith.constant 0 : index
    %122 = vector.load %arg6[%c0_47, %c2, %c0_48] : memref<14x14x128xf32, #tpu.memory_space<vmem>>, vector<14x8x128xf32>
    %123 = vector.extract_strided_slice %122 {offsets = [0, 0, 0], sizes = [8, 8, 128], strides = [1, 1, 1]} : vector<14x8x128xf32> to vector<8x8x128xf32>
    %c2_49 = arith.constant 2 : index
    %c0_50 = arith.constant 0 : index
    %124 = vector.load %arg3[%c2_49, %c0_50] : memref<49x128xf32, #tpu.memory_space<vmem>>, vector<1x128xf32>
    %125 = vector.shape_cast %124 : vector<1x128xf32> to vector<128xf32>
    %126 = vector.shape_cast %125 : vector<128xf32> to vector<1x1x128xf32>
    %127 = vector.broadcast %126 : vector<1x1x128xf32> to vector<8x8x128xf32>
    %128 = arith.mulf %123, %127 : vector<8x8x128xf32>
    %129 = arith.addf %121, %128 : vector<8x8x128xf32>
    %130 = vector.extract_strided_slice %122 {offsets = [1, 0, 0], sizes = [8, 8, 128], strides = [1, 1, 1]} : vector<14x8x128xf32> to vector<8x8x128xf32>
    %c9 = arith.constant 9 : index
    %c0_51 = arith.constant 0 : index
    %131 = vector.load %arg3[%c9, %c0_51] : memref<49x128xf32, #tpu.memory_space<vmem>>, vector<1x128xf32>
    %132 = vector.shape_cast %131 : vector<1x128xf32> to vector<128xf32>
    %133 = vector.shape_cast %132 : vector<128xf32> to vector<1x1x128xf32>
    %134 = vector.broadcast %133 : vector<1x1x128xf32> to vector<8x8x128xf32>
    %135 = arith.mulf %130, %134 : vector<8x8x128xf32>
    %136 = arith.addf %129, %135 : vector<8x8x128xf32>
    %137 = vector.extract_strided_slice %122 {offsets = [2, 0, 0], sizes = [8, 8, 128], strides = [1, 1, 1]} : vector<14x8x128xf32> to vector<8x8x128xf32>
    %c16 = arith.constant 16 : index
    %c0_52 = arith.constant 0 : index
    %138 = vector.load %arg3[%c16, %c0_52] : memref<49x128xf32, #tpu.memory_space<vmem>>, vector<1x128xf32>
    %139 = vector.shape_cast %138 : vector<1x128xf32> to vector<128xf32>
    %140 = vector.shape_cast %139 : vector<128xf32> to vector<1x1x128xf32>
    %141 = vector.broadcast %140 : vector<1x1x128xf32> to vector<8x8x128xf32>
    %142 = arith.mulf %137, %141 : vector<8x8x128xf32>
    %143 = arith.addf %136, %142 : vector<8x8x128xf32>
    %144 = vector.extract_strided_slice %122 {offsets = [3, 0, 0], sizes = [8, 8, 128], strides = [1, 1, 1]} : vector<14x8x128xf32> to vector<8x8x128xf32>
    %c23 = arith.constant 23 : index
    %c0_53 = arith.constant 0 : index
    %145 = vector.load %arg3[%c23, %c0_53] : memref<49x128xf32, #tpu.memory_space<vmem>>, vector<1x128xf32>
    %146 = vector.shape_cast %145 : vector<1x128xf32> to vector<128xf32>
    %147 = vector.shape_cast %146 : vector<128xf32> to vector<1x1x128xf32>
    %148 = vector.broadcast %147 : vector<1x1x128xf32> to vector<8x8x128xf32>
    %149 = arith.mulf %144, %148 : vector<8x8x128xf32>
    %150 = arith.addf %143, %149 : vector<8x8x128xf32>
    %151 = vector.extract_strided_slice %122 {offsets = [4, 0, 0], sizes = [8, 8, 128], strides = [1, 1, 1]} : vector<14x8x128xf32> to vector<8x8x128xf32>
    %c30 = arith.constant 30 : index
    %c0_54 = arith.constant 0 : index
    %152 = vector.load %arg3[%c30, %c0_54] : memref<49x128xf32, #tpu.memory_space<vmem>>, vector<1x128xf32>
    %153 = vector.shape_cast %152 : vector<1x128xf32> to vector<128xf32>
    %154 = vector.shape_cast %153 : vector<128xf32> to vector<1x1x128xf32>
    %155 = vector.broadcast %154 : vector<1x1x128xf32> to vector<8x8x128xf32>
    %156 = arith.mulf %151, %155 : vector<8x8x128xf32>
    %157 = arith.addf %150, %156 : vector<8x8x128xf32>
    %158 = vector.extract_strided_slice %122 {offsets = [5, 0, 0], sizes = [8, 8, 128], strides = [1, 1, 1]} : vector<14x8x128xf32> to vector<8x8x128xf32>
    %c37 = arith.constant 37 : index
    %c0_55 = arith.constant 0 : index
    %159 = vector.load %arg3[%c37, %c0_55] : memref<49x128xf32, #tpu.memory_space<vmem>>, vector<1x128xf32>
    %160 = vector.shape_cast %159 : vector<1x128xf32> to vector<128xf32>
    %161 = vector.shape_cast %160 : vector<128xf32> to vector<1x1x128xf32>
    %162 = vector.broadcast %161 : vector<1x1x128xf32> to vector<8x8x128xf32>
    %163 = arith.mulf %158, %162 : vector<8x8x128xf32>
    %164 = arith.addf %157, %163 : vector<8x8x128xf32>
    %165 = vector.extract_strided_slice %122 {offsets = [6, 0, 0], sizes = [8, 8, 128], strides = [1, 1, 1]} : vector<14x8x128xf32> to vector<8x8x128xf32>
    %c44 = arith.constant 44 : index
    %c0_56 = arith.constant 0 : index
    %166 = vector.load %arg3[%c44, %c0_56] : memref<49x128xf32, #tpu.memory_space<vmem>>, vector<1x128xf32>
    %167 = vector.shape_cast %166 : vector<1x128xf32> to vector<128xf32>
    %168 = vector.shape_cast %167 : vector<128xf32> to vector<1x1x128xf32>
    %169 = vector.broadcast %168 : vector<1x1x128xf32> to vector<8x8x128xf32>
    %170 = arith.mulf %165, %169 : vector<8x8x128xf32>
    %171 = arith.addf %164, %170 : vector<8x8x128xf32>
    %c0_57 = arith.constant 0 : index
    %c3_58 = arith.constant 3 : index
    %c0_59 = arith.constant 0 : index
    %172 = vector.load %arg6[%c0_57, %c3_58, %c0_59] : memref<14x14x128xf32, #tpu.memory_space<vmem>>, vector<14x8x128xf32>
    %173 = vector.extract_strided_slice %172 {offsets = [0, 0, 0], sizes = [8, 8, 128], strides = [1, 1, 1]} : vector<14x8x128xf32> to vector<8x8x128xf32>
    %c3_60 = arith.constant 3 : index
    %c0_61 = arith.constant 0 : index
    %174 = vector.load %arg3[%c3_60, %c0_61] : memref<49x128xf32, #tpu.memory_space<vmem>>, vector<1x128xf32>
    %175 = vector.shape_cast %174 : vector<1x128xf32> to vector<128xf32>
    %176 = vector.shape_cast %175 : vector<128xf32> to vector<1x1x128xf32>
    %177 = vector.broadcast %176 : vector<1x1x128xf32> to vector<8x8x128xf32>
    %178 = arith.mulf %173, %177 : vector<8x8x128xf32>
    %179 = arith.addf %171, %178 : vector<8x8x128xf32>
    %180 = vector.extract_strided_slice %172 {offsets = [1, 0, 0], sizes = [8, 8, 128], strides = [1, 1, 1]} : vector<14x8x128xf32> to vector<8x8x128xf32>
    %c10 = arith.constant 10 : index
    %c0_62 = arith.constant 0 : index
    %181 = vector.load %arg3[%c10, %c0_62] : memref<49x128xf32, #tpu.memory_space<vmem>>, vector<1x128xf32>
    %182 = vector.shape_cast %181 : vector<1x128xf32> to vector<128xf32>
    %183 = vector.shape_cast %182 : vector<128xf32> to vector<1x1x128xf32>
    %184 = vector.broadcast %183 : vector<1x1x128xf32> to vector<8x8x128xf32>
    %185 = arith.mulf %180, %184 : vector<8x8x128xf32>
    %186 = arith.addf %179, %185 : vector<8x8x128xf32>
    %187 = vector.extract_strided_slice %172 {offsets = [2, 0, 0], sizes = [8, 8, 128], strides = [1, 1, 1]} : vector<14x8x128xf32> to vector<8x8x128xf32>
    %c17 = arith.constant 17 : index
    %c0_63 = arith.constant 0 : index
    %188 = vector.load %arg3[%c17, %c0_63] : memref<49x128xf32, #tpu.memory_space<vmem>>, vector<1x128xf32>
    %189 = vector.shape_cast %188 : vector<1x128xf32> to vector<128xf32>
    %190 = vector.shape_cast %189 : vector<128xf32> to vector<1x1x128xf32>
    %191 = vector.broadcast %190 : vector<1x1x128xf32> to vector<8x8x128xf32>
    %192 = arith.mulf %187, %191 : vector<8x8x128xf32>
    %193 = arith.addf %186, %192 : vector<8x8x128xf32>
    %194 = vector.extract_strided_slice %172 {offsets = [3, 0, 0], sizes = [8, 8, 128], strides = [1, 1, 1]} : vector<14x8x128xf32> to vector<8x8x128xf32>
    %c24 = arith.constant 24 : index
    %c0_64 = arith.constant 0 : index
    %195 = vector.load %arg3[%c24, %c0_64] : memref<49x128xf32, #tpu.memory_space<vmem>>, vector<1x128xf32>
    %196 = vector.shape_cast %195 : vector<1x128xf32> to vector<128xf32>
    %197 = vector.shape_cast %196 : vector<128xf32> to vector<1x1x128xf32>
    %198 = vector.broadcast %197 : vector<1x1x128xf32> to vector<8x8x128xf32>
    %199 = arith.mulf %194, %198 : vector<8x8x128xf32>
    %200 = arith.addf %193, %199 : vector<8x8x128xf32>
    %201 = vector.extract_strided_slice %172 {offsets = [4, 0, 0], sizes = [8, 8, 128], strides = [1, 1, 1]} : vector<14x8x128xf32> to vector<8x8x128xf32>
    %c31 = arith.constant 31 : index
    %c0_65 = arith.constant 0 : index
    %202 = vector.load %arg3[%c31, %c0_65] : memref<49x128xf32, #tpu.memory_space<vmem>>, vector<1x128xf32>
    %203 = vector.shape_cast %202 : vector<1x128xf32> to vector<128xf32>
    %204 = vector.shape_cast %203 : vector<128xf32> to vector<1x1x128xf32>
    %205 = vector.broadcast %204 : vector<1x1x128xf32> to vector<8x8x128xf32>
    %206 = arith.mulf %201, %205 : vector<8x8x128xf32>
    %207 = arith.addf %200, %206 : vector<8x8x128xf32>
    %208 = vector.extract_strided_slice %172 {offsets = [5, 0, 0], sizes = [8, 8, 128], strides = [1, 1, 1]} : vector<14x8x128xf32> to vector<8x8x128xf32>
    %c38 = arith.constant 38 : index
    %c0_66 = arith.constant 0 : index
    %209 = vector.load %arg3[%c38, %c0_66] : memref<49x128xf32, #tpu.memory_space<vmem>>, vector<1x128xf32>
    %210 = vector.shape_cast %209 : vector<1x128xf32> to vector<128xf32>
    %211 = vector.shape_cast %210 : vector<128xf32> to vector<1x1x128xf32>
    %212 = vector.broadcast %211 : vector<1x1x128xf32> to vector<8x8x128xf32>
    %213 = arith.mulf %208, %212 : vector<8x8x128xf32>
    %214 = arith.addf %207, %213 : vector<8x8x128xf32>
    %215 = vector.extract_strided_slice %172 {offsets = [6, 0, 0], sizes = [8, 8, 128], strides = [1, 1, 1]} : vector<14x8x128xf32> to vector<8x8x128xf32>
    %c45 = arith.constant 45 : index
    %c0_67 = arith.constant 0 : index
    %216 = vector.load %arg3[%c45, %c0_67] : memref<49x128xf32, #tpu.memory_space<vmem>>, vector<1x128xf32>
    %217 = vector.shape_cast %216 : vector<1x128xf32> to vector<128xf32>
    %218 = vector.shape_cast %217 : vector<128xf32> to vector<1x1x128xf32>
    %219 = vector.broadcast %218 : vector<1x1x128xf32> to vector<8x8x128xf32>
    %220 = arith.mulf %215, %219 : vector<8x8x128xf32>
    %221 = arith.addf %214, %220 : vector<8x8x128xf32>
    %c0_68 = arith.constant 0 : index
    %c4 = arith.constant 4 : index
    %c0_69 = arith.constant 0 : index
    %222 = vector.load %arg6[%c0_68, %c4, %c0_69] : memref<14x14x128xf32, #tpu.memory_space<vmem>>, vector<14x8x128xf32>
    %223 = vector.extract_strided_slice %222 {offsets = [0, 0, 0], sizes = [8, 8, 128], strides = [1, 1, 1]} : vector<14x8x128xf32> to vector<8x8x128xf32>
    %c4_70 = arith.constant 4 : index
    %c0_71 = arith.constant 0 : index
    %224 = vector.load %arg3[%c4_70, %c0_71] : memref<49x128xf32, #tpu.memory_space<vmem>>, vector<1x128xf32>
    %225 = vector.shape_cast %224 : vector<1x128xf32> to vector<128xf32>
    %226 = vector.shape_cast %225 : vector<128xf32> to vector<1x1x128xf32>
    %227 = vector.broadcast %226 : vector<1x1x128xf32> to vector<8x8x128xf32>
    %228 = arith.mulf %223, %227 : vector<8x8x128xf32>
    %229 = arith.addf %221, %228 : vector<8x8x128xf32>
    %230 = vector.extract_strided_slice %222 {offsets = [1, 0, 0], sizes = [8, 8, 128], strides = [1, 1, 1]} : vector<14x8x128xf32> to vector<8x8x128xf32>
    %c11_72 = arith.constant 11 : index
    %c0_73 = arith.constant 0 : index
    %231 = vector.load %arg3[%c11_72, %c0_73] : memref<49x128xf32, #tpu.memory_space<vmem>>, vector<1x128xf32>
    %232 = vector.shape_cast %231 : vector<1x128xf32> to vector<128xf32>
    %233 = vector.shape_cast %232 : vector<128xf32> to vector<1x1x128xf32>
    %234 = vector.broadcast %233 : vector<1x1x128xf32> to vector<8x8x128xf32>
    %235 = arith.mulf %230, %234 : vector<8x8x128xf32>
    %236 = arith.addf %229, %235 : vector<8x8x128xf32>
    %237 = vector.extract_strided_slice %222 {offsets = [2, 0, 0], sizes = [8, 8, 128], strides = [1, 1, 1]} : vector<14x8x128xf32> to vector<8x8x128xf32>
    %c18 = arith.constant 18 : index
    %c0_74 = arith.constant 0 : index
    %238 = vector.load %arg3[%c18, %c0_74] : memref<49x128xf32, #tpu.memory_space<vmem>>, vector<1x128xf32>
    %239 = vector.shape_cast %238 : vector<1x128xf32> to vector<128xf32>
    %240 = vector.shape_cast %239 : vector<128xf32> to vector<1x1x128xf32>
    %241 = vector.broadcast %240 : vector<1x1x128xf32> to vector<8x8x128xf32>
    %242 = arith.mulf %237, %241 : vector<8x8x128xf32>
    %243 = arith.addf %236, %242 : vector<8x8x128xf32>
    %244 = vector.extract_strided_slice %222 {offsets = [3, 0, 0], sizes = [8, 8, 128], strides = [1, 1, 1]} : vector<14x8x128xf32> to vector<8x8x128xf32>
    %c25 = arith.constant 25 : index
    %c0_75 = arith.constant 0 : index
    %245 = vector.load %arg3[%c25, %c0_75] : memref<49x128xf32, #tpu.memory_space<vmem>>, vector<1x128xf32>
    %246 = vector.shape_cast %245 : vector<1x128xf32> to vector<128xf32>
    %247 = vector.shape_cast %246 : vector<128xf32> to vector<1x1x128xf32>
    %248 = vector.broadcast %247 : vector<1x1x128xf32> to vector<8x8x128xf32>
    %249 = arith.mulf %244, %248 : vector<8x8x128xf32>
    %250 = arith.addf %243, %249 : vector<8x8x128xf32>
    %251 = vector.extract_strided_slice %222 {offsets = [4, 0, 0], sizes = [8, 8, 128], strides = [1, 1, 1]} : vector<14x8x128xf32> to vector<8x8x128xf32>
    %c32 = arith.constant 32 : index
    %c0_76 = arith.constant 0 : index
    %252 = vector.load %arg3[%c32, %c0_76] : memref<49x128xf32, #tpu.memory_space<vmem>>, vector<1x128xf32>
    %253 = vector.shape_cast %252 : vector<1x128xf32> to vector<128xf32>
    %254 = vector.shape_cast %253 : vector<128xf32> to vector<1x1x128xf32>
    %255 = vector.broadcast %254 : vector<1x1x128xf32> to vector<8x8x128xf32>
    %256 = arith.mulf %251, %255 : vector<8x8x128xf32>
    %257 = arith.addf %250, %256 : vector<8x8x128xf32>
    %258 = vector.extract_strided_slice %222 {offsets = [5, 0, 0], sizes = [8, 8, 128], strides = [1, 1, 1]} : vector<14x8x128xf32> to vector<8x8x128xf32>
    %c39 = arith.constant 39 : index
    %c0_77 = arith.constant 0 : index
    %259 = vector.load %arg3[%c39, %c0_77] : memref<49x128xf32, #tpu.memory_space<vmem>>, vector<1x128xf32>
    %260 = vector.shape_cast %259 : vector<1x128xf32> to vector<128xf32>
    %261 = vector.shape_cast %260 : vector<128xf32> to vector<1x1x128xf32>
    %262 = vector.broadcast %261 : vector<1x1x128xf32> to vector<8x8x128xf32>
    %263 = arith.mulf %258, %262 : vector<8x8x128xf32>
    %264 = arith.addf %257, %263 : vector<8x8x128xf32>
    %265 = vector.extract_strided_slice %222 {offsets = [6, 0, 0], sizes = [8, 8, 128], strides = [1, 1, 1]} : vector<14x8x128xf32> to vector<8x8x128xf32>
    %c46 = arith.constant 46 : index
    %c0_78 = arith.constant 0 : index
    %266 = vector.load %arg3[%c46, %c0_78] : memref<49x128xf32, #tpu.memory_space<vmem>>, vector<1x128xf32>
    %267 = vector.shape_cast %266 : vector<1x128xf32> to vector<128xf32>
    %268 = vector.shape_cast %267 : vector<128xf32> to vector<1x1x128xf32>
    %269 = vector.broadcast %268 : vector<1x1x128xf32> to vector<8x8x128xf32>
    %270 = arith.mulf %265, %269 : vector<8x8x128xf32>
    %271 = arith.addf %264, %270 : vector<8x8x128xf32>
    %c0_79 = arith.constant 0 : index
    %c5 = arith.constant 5 : index
    %c0_80 = arith.constant 0 : index
    %272 = vector.load %arg6[%c0_79, %c5, %c0_80] : memref<14x14x128xf32, #tpu.memory_space<vmem>>, vector<14x8x128xf32>
    %273 = vector.extract_strided_slice %272 {offsets = [0, 0, 0], sizes = [8, 8, 128], strides = [1, 1, 1]} : vector<14x8x128xf32> to vector<8x8x128xf32>
    %c5_81 = arith.constant 5 : index
    %c0_82 = arith.constant 0 : index
    %274 = vector.load %arg3[%c5_81, %c0_82] : memref<49x128xf32, #tpu.memory_space<vmem>>, vector<1x128xf32>
    %275 = vector.shape_cast %274 : vector<1x128xf32> to vector<128xf32>
    %276 = vector.shape_cast %275 : vector<128xf32> to vector<1x1x128xf32>
    %277 = vector.broadcast %276 : vector<1x1x128xf32> to vector<8x8x128xf32>
    %278 = arith.mulf %273, %277 : vector<8x8x128xf32>
    %279 = arith.addf %271, %278 : vector<8x8x128xf32>
    %280 = vector.extract_strided_slice %272 {offsets = [1, 0, 0], sizes = [8, 8, 128], strides = [1, 1, 1]} : vector<14x8x128xf32> to vector<8x8x128xf32>
    %c12 = arith.constant 12 : index
    %c0_83 = arith.constant 0 : index
    %281 = vector.load %arg3[%c12, %c0_83] : memref<49x128xf32, #tpu.memory_space<vmem>>, vector<1x128xf32>
    %282 = vector.shape_cast %281 : vector<1x128xf32> to vector<128xf32>
    %283 = vector.shape_cast %282 : vector<128xf32> to vector<1x1x128xf32>
    %284 = vector.broadcast %283 : vector<1x1x128xf32> to vector<8x8x128xf32>
    %285 = arith.mulf %280, %284 : vector<8x8x128xf32>
    %286 = arith.addf %279, %285 : vector<8x8x128xf32>
    %287 = vector.extract_strided_slice %272 {offsets = [2, 0, 0], sizes = [8, 8, 128], strides = [1, 1, 1]} : vector<14x8x128xf32> to vector<8x8x128xf32>
    %c19 = arith.constant 19 : index
    %c0_84 = arith.constant 0 : index
    %288 = vector.load %arg3[%c19, %c0_84] : memref<49x128xf32, #tpu.memory_space<vmem>>, vector<1x128xf32>
    %289 = vector.shape_cast %288 : vector<1x128xf32> to vector<128xf32>
    %290 = vector.shape_cast %289 : vector<128xf32> to vector<1x1x128xf32>
    %291 = vector.broadcast %290 : vector<1x1x128xf32> to vector<8x8x128xf32>
    %292 = arith.mulf %287, %291 : vector<8x8x128xf32>
    %293 = arith.addf %286, %292 : vector<8x8x128xf32>
    %294 = vector.extract_strided_slice %272 {offsets = [3, 0, 0], sizes = [8, 8, 128], strides = [1, 1, 1]} : vector<14x8x128xf32> to vector<8x8x128xf32>
    %c26 = arith.constant 26 : index
    %c0_85 = arith.constant 0 : index
    %295 = vector.load %arg3[%c26, %c0_85] : memref<49x128xf32, #tpu.memory_space<vmem>>, vector<1x128xf32>
    %296 = vector.shape_cast %295 : vector<1x128xf32> to vector<128xf32>
    %297 = vector.shape_cast %296 : vector<128xf32> to vector<1x1x128xf32>
    %298 = vector.broadcast %297 : vector<1x1x128xf32> to vector<8x8x128xf32>
    %299 = arith.mulf %294, %298 : vector<8x8x128xf32>
    %300 = arith.addf %293, %299 : vector<8x8x128xf32>
    %301 = vector.extract_strided_slice %272 {offsets = [4, 0, 0], sizes = [8, 8, 128], strides = [1, 1, 1]} : vector<14x8x128xf32> to vector<8x8x128xf32>
    %c33 = arith.constant 33 : index
    %c0_86 = arith.constant 0 : index
    %302 = vector.load %arg3[%c33, %c0_86] : memref<49x128xf32, #tpu.memory_space<vmem>>, vector<1x128xf32>
    %303 = vector.shape_cast %302 : vector<1x128xf32> to vector<128xf32>
    %304 = vector.shape_cast %303 : vector<128xf32> to vector<1x1x128xf32>
    %305 = vector.broadcast %304 : vector<1x1x128xf32> to vector<8x8x128xf32>
    %306 = arith.mulf %301, %305 : vector<8x8x128xf32>
    %307 = arith.addf %300, %306 : vector<8x8x128xf32>
    %308 = vector.extract_strided_slice %272 {offsets = [5, 0, 0], sizes = [8, 8, 128], strides = [1, 1, 1]} : vector<14x8x128xf32> to vector<8x8x128xf32>
    %c40 = arith.constant 40 : index
    %c0_87 = arith.constant 0 : index
    %309 = vector.load %arg3[%c40, %c0_87] : memref<49x128xf32, #tpu.memory_space<vmem>>, vector<1x128xf32>
    %310 = vector.shape_cast %309 : vector<1x128xf32> to vector<128xf32>
    %311 = vector.shape_cast %310 : vector<128xf32> to vector<1x1x128xf32>
    %312 = vector.broadcast %311 : vector<1x1x128xf32> to vector<8x8x128xf32>
    %313 = arith.mulf %308, %312 : vector<8x8x128xf32>
    %314 = arith.addf %307, %313 : vector<8x8x128xf32>
    %315 = vector.extract_strided_slice %272 {offsets = [6, 0, 0], sizes = [8, 8, 128], strides = [1, 1, 1]} : vector<14x8x128xf32> to vector<8x8x128xf32>
    %c47 = arith.constant 47 : index
    %c0_88 = arith.constant 0 : index
    %316 = vector.load %arg3[%c47, %c0_88] : memref<49x128xf32, #tpu.memory_space<vmem>>, vector<1x128xf32>
    %317 = vector.shape_cast %316 : vector<1x128xf32> to vector<128xf32>
    %318 = vector.shape_cast %317 : vector<128xf32> to vector<1x1x128xf32>
    %319 = vector.broadcast %318 : vector<1x1x128xf32> to vector<8x8x128xf32>
    %320 = arith.mulf %315, %319 : vector<8x8x128xf32>
    %321 = arith.addf %314, %320 : vector<8x8x128xf32>
    %c0_89 = arith.constant 0 : index
    %c6 = arith.constant 6 : index
    %c0_90 = arith.constant 0 : index
    %322 = vector.load %arg6[%c0_89, %c6, %c0_90] : memref<14x14x128xf32, #tpu.memory_space<vmem>>, vector<14x8x128xf32>
    %323 = vector.extract_strided_slice %322 {offsets = [0, 0, 0], sizes = [8, 8, 128], strides = [1, 1, 1]} : vector<14x8x128xf32> to vector<8x8x128xf32>
    %c6_91 = arith.constant 6 : index
    %c0_92 = arith.constant 0 : index
    %324 = vector.load %arg3[%c6_91, %c0_92] : memref<49x128xf32, #tpu.memory_space<vmem>>, vector<1x128xf32>
    %325 = vector.shape_cast %324 : vector<1x128xf32> to vector<128xf32>
    %326 = vector.shape_cast %325 : vector<128xf32> to vector<1x1x128xf32>
    %327 = vector.broadcast %326 : vector<1x1x128xf32> to vector<8x8x128xf32>
    %328 = arith.mulf %323, %327 : vector<8x8x128xf32>
    %329 = arith.addf %321, %328 : vector<8x8x128xf32>
    %330 = vector.extract_strided_slice %322 {offsets = [1, 0, 0], sizes = [8, 8, 128], strides = [1, 1, 1]} : vector<14x8x128xf32> to vector<8x8x128xf32>
    %c13 = arith.constant 13 : index
    %c0_93 = arith.constant 0 : index
    %331 = vector.load %arg3[%c13, %c0_93] : memref<49x128xf32, #tpu.memory_space<vmem>>, vector<1x128xf32>
    %332 = vector.shape_cast %331 : vector<1x128xf32> to vector<128xf32>
    %333 = vector.shape_cast %332 : vector<128xf32> to vector<1x1x128xf32>
    %334 = vector.broadcast %333 : vector<1x1x128xf32> to vector<8x8x128xf32>
    %335 = arith.mulf %330, %334 : vector<8x8x128xf32>
    %336 = arith.addf %329, %335 : vector<8x8x128xf32>
    %337 = vector.extract_strided_slice %322 {offsets = [2, 0, 0], sizes = [8, 8, 128], strides = [1, 1, 1]} : vector<14x8x128xf32> to vector<8x8x128xf32>
    %c20 = arith.constant 20 : index
    %c0_94 = arith.constant 0 : index
    %338 = vector.load %arg3[%c20, %c0_94] : memref<49x128xf32, #tpu.memory_space<vmem>>, vector<1x128xf32>
    %339 = vector.shape_cast %338 : vector<1x128xf32> to vector<128xf32>
    %340 = vector.shape_cast %339 : vector<128xf32> to vector<1x1x128xf32>
    %341 = vector.broadcast %340 : vector<1x1x128xf32> to vector<8x8x128xf32>
    %342 = arith.mulf %337, %341 : vector<8x8x128xf32>
    %343 = arith.addf %336, %342 : vector<8x8x128xf32>
    %344 = vector.extract_strided_slice %322 {offsets = [3, 0, 0], sizes = [8, 8, 128], strides = [1, 1, 1]} : vector<14x8x128xf32> to vector<8x8x128xf32>
    %c27 = arith.constant 27 : index
    %c0_95 = arith.constant 0 : index
    %345 = vector.load %arg3[%c27, %c0_95] : memref<49x128xf32, #tpu.memory_space<vmem>>, vector<1x128xf32>
    %346 = vector.shape_cast %345 : vector<1x128xf32> to vector<128xf32>
    %347 = vector.shape_cast %346 : vector<128xf32> to vector<1x1x128xf32>
    %348 = vector.broadcast %347 : vector<1x1x128xf32> to vector<8x8x128xf32>
    %349 = arith.mulf %344, %348 : vector<8x8x128xf32>
    %350 = arith.addf %343, %349 : vector<8x8x128xf32>
    %351 = vector.extract_strided_slice %322 {offsets = [4, 0, 0], sizes = [8, 8, 128], strides = [1, 1, 1]} : vector<14x8x128xf32> to vector<8x8x128xf32>
    %c34 = arith.constant 34 : index
    %c0_96 = arith.constant 0 : index
    %352 = vector.load %arg3[%c34, %c0_96] : memref<49x128xf32, #tpu.memory_space<vmem>>, vector<1x128xf32>
    %353 = vector.shape_cast %352 : vector<1x128xf32> to vector<128xf32>
    %354 = vector.shape_cast %353 : vector<128xf32> to vector<1x1x128xf32>
    %355 = vector.broadcast %354 : vector<1x1x128xf32> to vector<8x8x128xf32>
    %356 = arith.mulf %351, %355 : vector<8x8x128xf32>
    %357 = arith.addf %350, %356 : vector<8x8x128xf32>
    %358 = vector.extract_strided_slice %322 {offsets = [5, 0, 0], sizes = [8, 8, 128], strides = [1, 1, 1]} : vector<14x8x128xf32> to vector<8x8x128xf32>
    %c41 = arith.constant 41 : index
    %c0_97 = arith.constant 0 : index
    %359 = vector.load %arg3[%c41, %c0_97] : memref<49x128xf32, #tpu.memory_space<vmem>>, vector<1x128xf32>
    %360 = vector.shape_cast %359 : vector<1x128xf32> to vector<128xf32>
    %361 = vector.shape_cast %360 : vector<128xf32> to vector<1x1x128xf32>
    %362 = vector.broadcast %361 : vector<1x1x128xf32> to vector<8x8x128xf32>
    %363 = arith.mulf %358, %362 : vector<8x8x128xf32>
    %364 = arith.addf %357, %363 : vector<8x8x128xf32>
    %365 = vector.extract_strided_slice %322 {offsets = [6, 0, 0], sizes = [8, 8, 128], strides = [1, 1, 1]} : vector<14x8x128xf32> to vector<8x8x128xf32>
    %c48 = arith.constant 48 : index
    %c0_98 = arith.constant 0 : index
    %366 = vector.load %arg3[%c48, %c0_98] : memref<49x128xf32, #tpu.memory_space<vmem>>, vector<1x128xf32>
    %367 = vector.shape_cast %366 : vector<1x128xf32> to vector<128xf32>
    %368 = vector.shape_cast %367 : vector<128xf32> to vector<1x1x128xf32>
    %369 = vector.broadcast %368 : vector<1x1x128xf32> to vector<8x8x128xf32>
    %370 = arith.mulf %365, %369 : vector<8x8x128xf32>
    %371 = arith.addf %364, %370 : vector<8x8x128xf32>
    %372 = vector.shape_cast %371 : vector<8x8x128xf32> to vector<64x128xf32>
    %c0_99 = arith.constant 0 : index
    %c1_100 = arith.constant 1 : index
    %c0_101 = arith.constant 0 : index
    %373 = vector.load %arg5[%c0_99, %c1_100, %c0_101] : memref<1x65x128xf32, #tpu.memory_space<vmem>>, vector<1x64x128xf32>
    %374 = vector.shape_cast %373 : vector<1x64x128xf32> to vector<64x128xf32>
    %375 = vector.shape_cast %372 : vector<64x128xf32> to vector<1x64x128xf32>
    tpu.vector_store %arg5[%c0_99, %c1_100, %c0_101], %375 {strides = array<i32>} : memref<1x65x128xf32, #tpu.memory_space<vmem>>, vector<1x64x128xf32>,
    return
  }
  func.func @transform_0(%arg0: i32, %arg1: i32) -> (i32, i32, i32) {
    %c0_i32 = arith.constant 0 : i32
    %c0_i32_0 = arith.constant 0 : i32
    return %arg1, %c0_i32, %arg0 : i32, i32, i32
  }
  func.func @transform_1(%arg0: i32, %arg1: i32) -> (i32, i32) {
    %c0_i32 = arith.constant 0 : i32
    %c0_i32_0 = arith.constant 0 : i32
    return %c0_i32, %arg0 : i32, i32
  }
  func.func @transform_2(%arg0: i32, %arg1: i32) -> (i32, i32) {
    %c0_i32 = arith.constant 0 : i32
    %c0_i32_0 = arith.constant 0 : i32
    return %c0_i32, %arg0 : i32, i32
  }
  func.func @transform_3(%arg0: i32, %arg1: i32) -> (i32, i32, i32) {
    %c0_i32 = arith.constant 0 : i32
    %c0_i32_0 = arith.constant 0 : i32
    return %arg1, %c0_i32, %arg0 : i32, i32, i32
  }
}

</mosaic_0001>

<llo_original>
// kernel: tpu_custom_call.1
$region0: #{tpu_custom_call.1}
  #allocation0 [shape = 'u32[]', space=smem, size = 0x4, offset = 0x4, fixed_abs, tag = 'smem constant byte address 0x4 - core index']
  #allocation1 [shape = 'u32[72,128]{1,0:T(1,128)}', space=vmem, size = 0x9000, scoped, tag = 'internal scratch']
  #allocation2 [shape = 'f32[14,14,128]{2,1,0:T(8,128)}', space=vmem, size = 0x1c000, scoped, tag = 'scratch operand']
  %s0 = inlined_call_operand.vmem [shape: f32[2,65,128], index: 0, kind: input, shape index: {}]
  %s1 = inlined_call_operand.vmem [shape: f32[49,128], index: 1, kind: input, shape index: {}]
  %s2 = inlined_call_operand.vmem [shape: f32[1,128], index: 2, kind: input, shape index: {}]
  %s3 = inlined_call_operand.vmem [shape: f32[2,65,128], index: 3, kind: output, shape index: {}]
  %s4 = sld [smem:[#allocation0]]
  $region45: #{tpu_custom_call.1} parent=0
    _
  %s6 = ssub.s32 1, %s4
  %s7 = scalar_select 0, %s6, %s4
  loop: start=0, step=1, limit=4
  $region2: #{tpu_custom_call.1} parent=0 // loop_pre_header
    _
  $region3: #{tpu_custom_call.1} parent=0 // loop_header
    %s9 = sphi 0, %s13
    %p10 = scmp.ge.s32.totalorder %s9, 4
    %s16 = sphi 0, %s28
    %s17 = sphi 0, %s24
    %s18 = sphi 0, %s16
    %s19 = sphi 0, %s17
    %s20 = sphi 0, %s18
    %s21 = sphi 0, %s19
    %s33 = sphi 0, %s35
    %s36 = sphi 0, %s33
    %s37 = sphi 0, %s36
    %s53 = sphi 0, %s37
    %s59 = sphi 0, %s61
    %s62 = sphi 0, %s59
    %s63 = sphi 0, %s62
    %s79 = sphi 0, %s63
    %s85 = sphi 0, %s87
    %s88 = sphi 0, %s85
    %s89 = sphi 0, %s88
    %s105 = sphi 0, %s89
    %s113 = sphi 0, %s115
    %s116 = sphi 0, %s113
    %s117 = sphi 0, %s116
    %s133 = sphi 0, %s117
  $region4: #{tpu_custom_call.1} parent=0 // loop_header_branch
    %12 = sbr.rel (%p10) target = $region8
  $region5: #{tpu_custom_call.1} parent=0 // loop_body
    %s14 = ssub.s32 %s9, 1
    %s15 = ssub.s32 %s9, 2
    %s22 = sadd.s32 1, %s17
    %p23 = scmp.ge.s32.totalorder %s22, 2
    %s24 = scalar_select %p23, 0, %s22
    %s25 = sadd.s32 1, %s16
    %s26 = scalar_select %p23, %s25, %s16
    %p27 = scmp.ge.s32.totalorder %s26, 1
    %s28 = scalar_select %p27, 0, %s26
    %s29 = ssub.s32 %s17, %s24
    %s30 = ssub.s32 %s16, %s28
    %s31 = sor.u32 %s29, %s30
    %p32 = scmp.eq.s32.totalorder %s31, 0
    %s34 = sadd.s32 %s33, 1
    %s35 = scalar_select %p32, %s33, %s34
    %p38 = pneg %p32
    %p39 = scmp.eq.s32.totalorder %s9, 1
    %p40 = por %p38, %p39
    %p41 = scmp.ne.s32.totalorder %s33, %s36
    %p42 = scmp.eq.s32.totalorder %s9, 0
    %p43 = por %p41, %p42
    %p44 = scmp.ne.s32.totalorder %s33, %s36
    %p45 = scmp.eq.s32.totalorder %s14, 1
    %p46 = por %p44, %p45
    %p47 = scmp.ne.s32.totalorder %s36, %s37
    %p48 = scmp.eq.s32.totalorder %s14, 0
    %p49 = por %p47, %p48
    %p50 = scmp.ne.s32.totalorder %s36, %s37
    %p51 = scmp.eq.s32.totalorder %s15, 1
    %p52 = por %p50, %p51
    %p54 = scmp.ne.s32.totalorder %s37, %s53
    %p55 = scmp.eq.s32.totalorder %s15, 0
    %p56 = por %p54, %p55
    %s57 = ssub.s32 %s16, %s28
    %p58 = scmp.eq.s32.totalorder %s57, 0
    %s60 = sadd.s32 %s59, 1
    %s61 = scalar_select %p58, %s59, %s60
    %p64 = pneg %p58
    %p65 = scmp.eq.s32.totalorder %s9, 1
    %p66 = por %p64, %p65
    %p67 = scmp.ne.s32.totalorder %s59, %s62
    %p68 = scmp.eq.s32.totalorder %s9, 0
    %p69 = por %p67, %p68
    %p70 = scmp.ne.s32.totalorder %s59, %s62
    %p71 = scmp.eq.s32.totalorder %s14, 1
    %p72 = por %p70, %p71
    %p73 = scmp.ne.s32.totalorder %s62, %s63
    %p74 = scmp.eq.s32.totalorder %s14, 0
    %p75 = por %p73, %p74
    %p76 = scmp.ne.s32.totalorder %s62, %s63
    %p77 = scmp.eq.s32.totalorder %s15, 1
    %p78 = por %p76, %p77
    %p80 = scmp.ne.s32.totalorder %s63, %s79
    %p81 = scmp.eq.s32.totalorder %s15, 0
    %p82 = por %p80, %p81
    %s83 = ssub.s32 %s16, %s28
    %p84 = scmp.eq.s32.totalorder %s83, 0
    %s86 = sadd.s32 %s85, 1
    %s87 = scalar_select %p84, %s85, %s86
    %p90 = pneg %p84
    %p91 = scmp.eq.s32.totalorder %s9, 1
    %p92 = por %p90, %p91
    %p93 = scmp.ne.s32.totalorder %s85, %s88
    %p94 = scmp.eq.s32.totalorder %s9, 0
    %p95 = por %p93, %p94
    %p96 = scmp.ne.s32.totalorder %s85, %s88
    %p97 = scmp.eq.s32.totalorder %s14, 1
    %p98 = por %p96, %p97
    %p99 = scmp.ne.s32.totalorder %s88, %s89
    %p100 = scmp.eq.s32.totalorder %s14, 0
    %p101 = por %p99, %p100
    %p102 = scmp.ne.s32.totalorder %s88, %s89
    %p103 = scmp.eq.s32.totalorder %s15, 1
    %p104 = por %p102, %p103
    %p106 = scmp.ne.s32.totalorder %s89, %s105
    %p107 = scmp.eq.s32.totalorder %s15, 0
    %p108 = por %p106, %p107
    %s109 = ssub.s32 %s17, %s24
    %s110 = ssub.s32 %s16, %s28
    %s111 = sor.u32 %s109, %s110
    %p112 = scmp.eq.s32.totalorder %s111, 0
    %s114 = sadd.s32 %s113, 1
    %s115 = scalar_select %p112, %s113, %s114
    %p118 = pneg %p112
    %p119 = scmp.eq.s32.totalorder %s9, 1
    %p120 = por %p118, %p119
    %p121 = scmp.ne.s32.totalorder %s113, %s116
    %p122 = scmp.eq.s32.totalorder %s9, 0
    %p123 = por %p121, %p122
    %p124 = scmp.ne.s32.totalorder %s113, %s116
    %p125 = scmp.eq.s32.totalorder %s14, 1
    %p126 = por %p124, %p125
    %p127 = scmp.ne.s32.totalorder %s116, %s117
    %p128 = scmp.eq.s32.totalorder %s14, 0
    %p129 = por %p127, %p128
    %p130 = scmp.ne.s32.totalorder %s116, %s117
    %p131 = scmp.eq.s32.totalorder %s15, 1
    %p132 = por %p130, %p131
    %p134 = scmp.ne.s32.totalorder %s117, %s133
    %p135 = scmp.eq.s32.totalorder %s15, 0
    %p136 = por %p134, %p135
    %p137 = scmp.le.s32.totalorder 1, %s9
    %p138 = scmp.lt.s32.totalorder %s9, 3
    %p139 = pnand %p137, %p138
    %p140 = pneg %p139
    // Predicated region
    $region9: #{tpu_custom_call.1} parent=5 // pred_check
      _
    $region10: #{tpu_custom_call.1} parent=5 // pred_check_branch
      %142 = sbr.rel (%p139) target = $region12
    $region11: #{tpu_custom_call.1} parent=5 // pred_region
      %s143 = ssub.s32 %s9, 1
      // Predicated region
      $region13: #{tpu_custom_call.1} parent=11 // pred_check
        %p144 = pneg %p75
      $region14: #{tpu_custom_call.1} parent=11 // pred_check_branch
        %146 = sbr.rel (%p144) target = $region16
      $region15: #{tpu_custom_call.1} parent=11 // pred_region
        %p147 = scmp.lt.s32.totalorder %s18, 0
        %s148 = scalar_select %p147, %s18, 0
        %s149 = smul.addr %s148, 8
        %s150 = scalar_lea.vmem %s1, %s149
      $region16: #{tpu_custom_call.1} parent=11 // pred_fallthru
        _
      // Predicated region
      $region17: #{tpu_custom_call.1} parent=11 // pred_check
        %p151 = pneg %p101
      $region18: #{tpu_custom_call.1} parent=11 // pred_check_branch
        %153 = sbr.rel (%p151) target = $region20
      $region19: #{tpu_custom_call.1} parent=11 // pred_region
        %p154 = scmp.lt.s32.totalorder %s18, 0
        %s155 = scalar_select %p154, %s18, 0
        %s156 = scalar_lea.vmem %s2, %s155
      $region20: #{tpu_custom_call.1} parent=11 // pred_fallthru
        _
    $region12: #{tpu_custom_call.1} parent=5 // pred_fallthru
      _
    %p157 = scmp.lt.s32.totalorder %s9, 2
    // Predicated region
    $region21: #{tpu_custom_call.1} parent=5 // pred_check
      %p158 = pneg %p157
    $region22: #{tpu_custom_call.1} parent=5 // pred_check_branch
      %160 = sbr.rel (%p158) target = $region24
    $region23: #{tpu_custom_call.1} parent=5 // pred_region
      // Predicated region
      $region25: #{tpu_custom_call.1} parent=23 // pred_check
        %p161 = pneg %p43
      $region26: #{tpu_custom_call.1} parent=23 // pred_check_branch
        %163 = sbr.rel (%p161) target = $region28
      $region27: #{tpu_custom_call.1} parent=23 // pred_region
        %p164 = scmp.lt.s32.totalorder %s17, 1
        %s165 = scalar_select %p164, %s17, 1
        %p166 = scmp.lt.s32.totalorder %s16, 0
        %s167 = scalar_select %p166, %s16, 0
        %s168 = smul.addr %s165, 9
        %s169 = sadd.s32 %s167, %s168
        %s170 = smul.addr %s169, 8
        %s171 = scalar_lea.vmem %s0, %s170
      $region28: #{tpu_custom_call.1} parent=23 // pred_fallthru
        _
    $region24: #{tpu_custom_call.1} parent=5 // pred_fallthru
      _
    %p172 = scmp.le.s32.totalorder 1, %s9
    %p173 = scmp.lt.s32.totalorder %s9, 3
    %p174 = pnand %p172, %p173
    %p175 = pneg %p174
    // Predicated region
    $region29: #{tpu_custom_call.1} parent=5 // pred_check
      _
    $region30: #{tpu_custom_call.1} parent=5 // pred_check_branch
      %177 = sbr.rel (%p174) target = $region32
    $region31: #{tpu_custom_call.1} parent=5 // pred_region
      %s178 = ssub.s32 %s9, 1
      %p179 = scmp.lt.s32.totalorder %s19, 1
      %s180 = scalar_select %p179, %s19, 1
      %p181 = scmp.lt.s32.totalorder %s18, 0
      %s182 = scalar_select %p181, %s18, 0
      %s183 = smul.addr %s180, 9
      %s184 = sadd.s32 %s182, %s183
      %s185 = smul.addr %s184, 8
      %s186 = scalar_lea.vmem %s0, %s185
      %p187 = pneg %p49
      %p188 = pneg %p46
      %p189 = scmp.lt.s32.totalorder %s18, 0
      %s190 = scalar_select %p189, %s18, 0
      %s191 = smul.addr %s190, 8
      %s192 = scalar_lea.vmem %s1, %s191
      %p193 = pneg %p75
      %p194 = pneg %p72
      %p195 = scmp.lt.s32.totalorder %s18, 0
      %s196 = scalar_select %p195, %s18, 0
      %s197 = scalar_lea.vmem %s2, %s196
      %p198 = pneg %p101
      %p199 = pneg %p98
      %p200 = pneg %p129
      %p201 = pneg %p126
      %p202 = scmp.lt.s32.totalorder %s19, 1
      %s203 = scalar_select %p202, %s19, 1
      %p204 = scmp.lt.s32.totalorder %s18, 0
      %s205 = scalar_select %p204, %s18, 0
      %s206 = smul.addr %s203, 9
      %s207 = sadd.s32 %s205, %s206
      %s208 = smul.addr %s207, 8
      %s209 = scalar_lea.vmem %s3, %s208
      %p210 = scmp.lt.s32.totalorder %s19, 1
      %s211 = scalar_select %p210, %s19, 1
      %p212 = scmp.lt.s32.totalorder %s18, 0
      %s213 = scalar_select %p212, %s18, 0
      %s214 = smul.addr %s211, 9
      %s215 = sadd.s32 %s213, %s214
      %s216 = smul.addr %s215, 8
      %s217 = scalar_lea.vmem %s0, %s216
      %p218 = scmp.lt.s32.totalorder %s18, 0
      %s219 = scalar_select %p218, %s18, 0
      %s220 = smul.addr %s219, 8
      %s221 = scalar_lea.vmem %s1, %s220
      %p222 = scmp.lt.s32.totalorder %s18, 0
      %s223 = scalar_select %p222, %s18, 0
      %s224 = scalar_lea.vmem %s2, %s223
      %p225 = scmp.lt.s32.totalorder %s19, 1
      %s226 = scalar_select %p225, %s19, 1
      %p227 = scmp.lt.s32.totalorder %s18, 0
      %s228 = scalar_select %p227, %s18, 0
      %s229 = smul.addr %s226, 9
      %s230 = sadd.s32 %s228, %s229
      %s231 = smul.addr %s230, 8
      %s232 = scalar_lea.vmem %s3, %s231
      %v233 = vld [vmem:[%s217] sm:$0x1]
      %234 = vst [vmem:[%s232] sm:$0x1] %v233
      %235 = vst [vmem:[#allocation2] sm:$0xff] 0.0
      %236 = vst [vmem:[#allocation2 + $0x8] sm:$0x3f] 0.0
      %237 = vst [vmem:[#allocation2 + $0x10] sm:$0xff] 0.0
      %238 = vst [vmem:[#allocation2 + $0x18] sm:$0x3f] 0.0
      %239 = vst [vmem:[#allocation2 + $0x20] sm:$0xff] 0.0
      %240 = vst [vmem:[#allocation2 + $0x28] sm:$0x3f] 0.0
      %s241 = scalar_lea.vmem [#allocation2], 176
      %242 = vst [vmem:[%s241] sm:$0xff] 0.0
      %243 = vst [vmem:[%s241 + $0x8] sm:$0x3f] 0.0
      %244 = vst [vmem:[%s241 + $0x10] sm:$0xff] 0.0
      %245 = vst [vmem:[%s241 + $0x18] sm:$0x3f] 0.0
      %246 = vst [vmem:[%s241 + $0x20] sm:$0xff] 0.0
      %247 = vst [vmem:[%s241 + $0x28] sm:$0x3f] 0.0
      %s248 = scalar_lea.vmem [#allocation2], 48
      %249 = vst [vmem:[%s248] sm:$0x7] 0.0
      %250 = vst [vmem:[%s248 + $0x10] sm:$0x7] 0.0
      %251 = vst [vmem:[%s248 + $0x20] sm:$0x7] 0.0
      %252 = vst [vmem:[%s248 + $0x30] sm:$0x7] 0.0
      %253 = vst [vmem:[%s248 + $0x40] sm:$0x7] 0.0
      %254 = vst [vmem:[%s248 + $0x50] sm:$0x7] 0.0
      %255 = vst [vmem:[%s248 + $0x60] sm:$0x7] 0.0
      %256 = vst [vmem:[%s248 + $0x70] sm:$0x7] 0.0
      %257 = vst [vmem:[%s248 + $0xb] sm:$0x7] 0.0
      %258 = vst [vmem:[%s248 + $0x1b] sm:$0x7] 0.0
      %259 = vst [vmem:[%s248 + $0x2b] sm:$0x7] 0.0
      %260 = vst [vmem:[%s248 + $0x3b] sm:$0x7] 0.0
      %261 = vst [vmem:[%s248 + $0x4b] sm:$0x7] 0.0
      %262 = vst [vmem:[%s248 + $0x5b] sm:$0x7] 0.0
      %263 = vst [vmem:[%s248 + $0x6b] sm:$0x7] 0.0
      %264 = vst [vmem:[%s248 + $0x7b] sm:$0x7] 0.0
      %v265 = vld [vmem:[%s217 + $0x1] sm:$0xff]
      %v266 = vld [vmem:[%s217 + $0x9] sm:$0xff]
      %v267 = vld [vmem:[%s217 + $0x11] sm:$0xff]
      %v268 = vld [vmem:[%s217 + $0x19] sm:$0xff]
      %v269 = vld [vmem:[%s217 + $0x21] sm:$0xff]
      %v270 = vld [vmem:[%s217 + $0x29] sm:$0xff]
      %v271 = vld [vmem:[%s217 + $0x31] sm:$0xff]
      %v272 = vld [vmem:[%s217 + $0x39] sm:$0xff]
      %273 = vst [vmem:[%s248 + $0x3] sm:$0xff] %v265
      %274 = vst [vmem:[%s248 + $0x13] sm:$0xff] %v266
      %275 = vst [vmem:[%s248 + $0x23] sm:$0xff] %v267
      %276 = vst [vmem:[%s248 + $0x33] sm:$0xff] %v268
      %277 = vst [vmem:[%s248 + $0x43] sm:$0xff] %v269
      %278 = vst [vmem:[%s248 + $0x53] sm:$0xff] %v270
      %279 = vst [vmem:[%s248 + $0x63] sm:$0xff] %v271
      %280 = vst [vmem:[%s248 + $0x73] sm:$0xff] %v272
      %v281 = vld [vmem:[%s224] sm:$0x1]
      %v283 = vperm.slane %v281, 0
      %v285 = vld [vmem:[#allocation2] sm:$0xff]
      %v286 = vld [vmem:[#allocation2 + $0x10] sm:$0xff]
      %v287 = vld [vmem:[#allocation2 + $0x20] sm:$0xff]
      %v288 = vld [vmem:[#allocation2 + $0x30] sm:$0xff]
      %v289 = vld [vmem:[#allocation2 + $0x40] sm:$0xff]
      %v290 = vld [vmem:[#allocation2 + $0x50] sm:$0xff]
      %v291 = vld [vmem:[#allocation2 + $0x60] sm:$0xff]
      %v292 = vld [vmem:[#allocation2 + $0x70] sm:$0xff]
      %v293 = vld [vmem:[#allocation2 + $0x80] sm:$0xff]
      %v294 = vld [vmem:[#allocation2 + $0x90] sm:$0xff]
      %v295 = vld [vmem:[#allocation2 + $0xa0] sm:$0xff]
      %v296 = vld [vmem:[#allocation2 + $0xb0] sm:$0xff]
      %v297 = vld [vmem:[#allocation2 + $0xc0] sm:$0xff]
      %v298 = vld [vmem:[#allocation2 + $0xd0] sm:$0xff]
      %v299 = vld [vmem:[%s221] sm:$0x1]
      %v300 = vperm.slane %v299, 0
      %v301 = vmul.f32 %v285, %v300
      %v302 = vmul.f32 %v286, %v300
      %v303 = vmul.f32 %v287, %v300
      %v304 = vmul.f32 %v288, %v300
      %v305 = vmul.f32 %v289, %v300
      %v306 = vmul.f32 %v290, %v300
      %v307 = vmul.f32 %v291, %v300
      %v308 = vmul.f32 %v292, %v300
      %v309 = vadd.f32 %v283, %v301
      %v310 = vadd.f32 %v283, %v302
      %v311 = vadd.f32 %v283, %v303
      %v312 = vadd.f32 %v283, %v304
      %v313 = vadd.f32 %v283, %v305
      %v314 = vadd.f32 %v283, %v306
      %v315 = vadd.f32 %v283, %v307
      %v316 = vadd.f32 %v283, %v308
      %v317 = vld [vmem:[%s221 + $0x7] sm:$0x1]
      %v318 = vperm.slane %v317, 0
      %v319 = vmul.f32 %v286, %v318
      %v320 = vmul.f32 %v287, %v318
      %v321 = vmul.f32 %v288, %v318
      %v322 = vmul.f32 %v289, %v318
      %v323 = vmul.f32 %v290, %v318
      %v324 = vmul.f32 %v291, %v318
      %v325 = vmul.f32 %v292, %v318
      %v326 = vmul.f32 %v293, %v318
      %v327 = vadd.f32 %v309, %v319
      %v328 = vadd.f32 %v310, %v320
      %v329 = vadd.f32 %v311, %v321
      %v330 = vadd.f32 %v312, %v322
      %v331 = vadd.f32 %v313, %v323
      %v332 = vadd.f32 %v314, %v324
      %v333 = vadd.f32 %v315, %v325
      %v334 = vadd.f32 %v316, %v326
      %v335 = vld [vmem:[%s221 + $0xe] sm:$0x1]
      %v336 = vperm.slane %v335, 0
      %v337 = vmul.f32 %v287, %v336
      %v338 = vmul.f32 %v288, %v336
      %v339 = vmul.f32 %v289, %v336
      %v340 = vmul.f32 %v290, %v336
      %v341 = vmul.f32 %v291, %v336
      %v342 = vmul.f32 %v292, %v336
      %v343 = vmul.f32 %v293, %v336
      %v344 = vmul.f32 %v294, %v336
      %v345 = vadd.f32 %v327, %v337
      %v346 = vadd.f32 %v328, %v338
      %v347 = vadd.f32 %v329, %v339
      %v348 = vadd.f32 %v330, %v340
      %v349 = vadd.f32 %v331, %v341
      %v350 = vadd.f32 %v332, %v342
      %v351 = vadd.f32 %v333, %v343
      %v352 = vadd.f32 %v334, %v344
      %v353 = vld [vmem:[%s221 + $0x15] sm:$0x1]
      %v354 = vperm.slane %v353, 0
      %v355 = vmul.f32 %v288, %v354
      %v356 = vmul.f32 %v289, %v354
      %v357 = vmul.f32 %v290, %v354
      %v358 = vmul.f32 %v291, %v354
      %v359 = vmul.f32 %v292, %v354
      %v360 = vmul.f32 %v293, %v354
      %v361 = vmul.f32 %v294, %v354
      %v362 = vmul.f32 %v295, %v354
      %v363 = vadd.f32 %v345, %v355
      %v364 = vadd.f32 %v346, %v356
      %v365 = vadd.f32 %v347, %v357
      %v366 = vadd.f32 %v348, %v358
      %v367 = vadd.f32 %v349, %v359
      %v368 = vadd.f32 %v350, %v360
      %v369 = vadd.f32 %v351, %v361
      %v370 = vadd.f32 %v352, %v362
      %v371 = vld [vmem:[%s221 + $0x1c] sm:$0x1]
      %v372 = vperm.slane %v371, 0
      %v373 = vmul.f32 %v289, %v372
      %v374 = vmul.f32 %v290, %v372
      %v375 = vmul.f32 %v291, %v372
      %v376 = vmul.f32 %v292, %v372
      %v377 = vmul.f32 %v293, %v372
      %v378 = vmul.f32 %v294, %v372
      %v379 = vmul.f32 %v295, %v372
      %v380 = vmul.f32 %v296, %v372
      %v381 = vadd.f32 %v363, %v373
      %v382 = vadd.f32 %v364, %v374
      %v383 = vadd.f32 %v365, %v375
      %v384 = vadd.f32 %v366, %v376
      %v385 = vadd.f32 %v367, %v377
      %v386 = vadd.f32 %v368, %v378
      %v387 = vadd.f32 %v369, %v379
      %v388 = vadd.f32 %v370, %v380
      %v389 = vld [vmem:[%s221 + $0x23] sm:$0x1]
      %v390 = vperm.slane %v389, 0
      %v391 = vmul.f32 %v290, %v390
      %v392 = vmul.f32 %v291, %v390
      %v393 = vmul.f32 %v292, %v390
      %v394 = vmul.f32 %v293, %v390
      %v395 = vmul.f32 %v294, %v390
      %v396 = vmul.f32 %v295, %v390
      %v397 = vmul.f32 %v296, %v390
      %v398 = vmul.f32 %v297, %v390
      %v399 = vadd.f32 %v381, %v391
      %v400 = vadd.f32 %v382, %v392
      %v401 = vadd.f32 %v383, %v393
      %v402 = vadd.f32 %v384, %v394
      %v403 = vadd.f32 %v385, %v395
      %v404 = vadd.f32 %v386, %v396
      %v405 = vadd.f32 %v387, %v397
      %v406 = vadd.f32 %v388, %v398
      %v407 = vld [vmem:[%s221 + $0x2a] sm:$0x1]
      %v408 = vperm.slane %v407, 0
      %v409 = vmul.f32 %v291, %v408
      %v410 = vmul.f32 %v292, %v408
      %v411 = vmul.f32 %v293, %v408
      %v412 = vmul.f32 %v294, %v408
      %v413 = vmul.f32 %v295, %v408
      %v414 = vmul.f32 %v296, %v408
      %v415 = vmul.f32 %v297, %v408
      %v416 = vmul.f32 %v298, %v408
      %v417 = vadd.f32 %v399, %v409
      %v418 = vadd.f32 %v400, %v410
      %v419 = vadd.f32 %v401, %v411
      %v420 = vadd.f32 %v402, %v412
      %v421 = vadd.f32 %v403, %v413
      %v422 = vadd.f32 %v404, %v414
      %v423 = vadd.f32 %v405, %v415
      %v424 = vadd.f32 %v406, %v416
      %v425 = vld [vmem:[#allocation2 + $0x1] sm:$0xff]
      %v426 = vld [vmem:[#allocation2 + $0x11] sm:$0xff]
      %v427 = vld [vmem:[#allocation2 + $0x21] sm:$0xff]
      %v428 = vld [vmem:[#allocation2 + $0x31] sm:$0xff]
      %v429 = vld [vmem:[#allocation2 + $0x41] sm:$0xff]
      %v430 = vld [vmem:[#allocation2 + $0x51] sm:$0xff]
      %v431 = vld [vmem:[#allocation2 + $0x61] sm:$0xff]
      %v432 = vld [vmem:[#allocation2 + $0x71] sm:$0xff]
      %v433 = vld [vmem:[#allocation2 + $0x81] sm:$0xff]
      %v434 = vld [vmem:[#allocation2 + $0x91] sm:$0xff]
      %v435 = vld [vmem:[#allocation2 + $0xa1] sm:$0xff]
      %v436 = vld [vmem:[#allocation2 + $0xb1] sm:$0xff]
      %v437 = vld [vmem:[#allocation2 + $0xc1] sm:$0xff]
      %v438 = vld [vmem:[#allocation2 + $0xd1] sm:$0xff]
      %v439 = vld [vmem:[%s221 + $0x1] sm:$0x1]
      %v440 = vperm.slane %v439, 0
      %v441 = vmul.f32 %v425, %v440
      %v442 = vmul.f32 %v426, %v440
      %v443 = vmul.f32 %v427, %v440
      %v444 = vmul.f32 %v428, %v440
      %v445 = vmul.f32 %v429, %v440
      %v446 = vmul.f32 %v430, %v440
      %v447 = vmul.f32 %v431, %v440
      %v448 = vmul.f32 %v432, %v440
      %v449 = vadd.f32 %v417, %v441
      %v450 = vadd.f32 %v418, %v442
      %v451 = vadd.f32 %v419, %v443
      %v452 = vadd.f32 %v420, %v444
      %v453 = vadd.f32 %v421, %v445
      %v454 = vadd.f32 %v422, %v446
      %v455 = vadd.f32 %v423, %v447
      %v456 = vadd.f32 %v424, %v448
      %v457 = vld [vmem:[%s221 + $0x8] sm:$0x1]
      %v458 = vperm.slane %v457, 0
      %v459 = vmul.f32 %v426, %v458
      %v460 = vmul.f32 %v427, %v458
      %v461 = vmul.f32 %v428, %v458
      %v462 = vmul.f32 %v429, %v458
      %v463 = vmul.f32 %v430, %v458
      %v464 = vmul.f32 %v431, %v458
      %v465 = vmul.f32 %v432, %v458
      %v466 = vmul.f32 %v433, %v458
      %v467 = vadd.f32 %v449, %v459
      %v468 = vadd.f32 %v450, %v460
      %v469 = vadd.f32 %v451, %v461
      %v470 = vadd.f32 %v452, %v462
      %v471 = vadd.f32 %v453, %v463
      %v472 = vadd.f32 %v454, %v464
      %v473 = vadd.f32 %v455, %v465
      %v474 = vadd.f32 %v456, %v466
      %v475 = vld [vmem:[%s221 + $0xf] sm:$0x1]
      %v476 = vperm.slane %v475, 0
      %v477 = vmul.f32 %v427, %v476
      %v478 = vmul.f32 %v428, %v476
      %v479 = vmul.f32 %v429, %v476
      %v480 = vmul.f32 %v430, %v476
      %v481 = vmul.f32 %v431, %v476
      %v482 = vmul.f32 %v432, %v476
      %v483 = vmul.f32 %v433, %v476
      %v484 = vmul.f32 %v434, %v476
      %v485 = vadd.f32 %v467, %v477
      %v486 = vadd.f32 %v468, %v478
      %v487 = vadd.f32 %v469, %v479
      %v488 = vadd.f32 %v470, %v480
      %v489 = vadd.f32 %v471, %v481
      %v490 = vadd.f32 %v472, %v482
      %v491 = vadd.f32 %v473, %v483
      %v492 = vadd.f32 %v474, %v484
      %v493 = vld [vmem:[%s221 + $0x16] sm:$0x1]
      %v494 = vperm.slane %v493, 0
      %v495 = vmul.f32 %v428, %v494
      %v496 = vmul.f32 %v429, %v494
      %v497 = vmul.f32 %v430, %v494
      %v498 = vmul.f32 %v431, %v494
      %v499 = vmul.f32 %v432, %v494
      %v500 = vmul.f32 %v433, %v494
      %v501 = vmul.f32 %v434, %v494
      %v502 = vmul.f32 %v435, %v494
      %v503 = vadd.f32 %v485, %v495
      %v504 = vadd.f32 %v486, %v496
      %v505 = vadd.f32 %v487, %v497
      %v506 = vadd.f32 %v488, %v498
      %v507 = vadd.f32 %v489, %v499
      %v508 = vadd.f32 %v490, %v500
      %v509 = vadd.f32 %v491, %v501
      %v510 = vadd.f32 %v492, %v502
      %v511 = vld [vmem:[%s221 + $0x1d] sm:$0x1]
      %v512 = vperm.slane %v511, 0
      %v513 = vmul.f32 %v429, %v512
      %v514 = vmul.f32 %v430, %v512
      %v515 = vmul.f32 %v431, %v512
      %v516 = vmul.f32 %v432, %v512
      %v517 = vmul.f32 %v433, %v512
      %v518 = vmul.f32 %v434, %v512
      %v519 = vmul.f32 %v435, %v512
      %v520 = vmul.f32 %v436, %v512
      %v521 = vadd.f32 %v503, %v513
      %v522 = vadd.f32 %v504, %v514
      %v523 = vadd.f32 %v505, %v515
      %v524 = vadd.f32 %v506, %v516
      %v525 = vadd.f32 %v507, %v517
      %v526 = vadd.f32 %v508, %v518
      %v527 = vadd.f32 %v509, %v519
      %v528 = vadd.f32 %v510, %v520
      %v529 = vld [vmem:[%s221 + $0x24] sm:$0x1]
      %v530 = vperm.slane %v529, 0
      %v531 = vmul.f32 %v430, %v530
      %v532 = vmul.f32 %v431, %v530
      %v533 = vmul.f32 %v432, %v530
      %v534 = vmul.f32 %v433, %v530
      %v535 = vmul.f32 %v434, %v530
      %v536 = vmul.f32 %v435, %v530
      %v537 = vmul.f32 %v436, %v530
      %v538 = vmul.f32 %v437, %v530
      %v539 = vadd.f32 %v521, %v531
      %v540 = vadd.f32 %v522, %v532
      %v541 = vadd.f32 %v523, %v533
      %v542 = vadd.f32 %v524, %v534
      %v543 = vadd.f32 %v525, %v535
      %v544 = vadd.f32 %v526, %v536
      %v545 = vadd.f32 %v527, %v537
      %v546 = vadd.f32 %v528, %v538
      %v547 = vld [vmem:[%s221 + $0x2b] sm:$0x1]
      %v548 = vperm.slane %v547, 0
      %v549 = vmul.f32 %v431, %v548
      %v550 = vmul.f32 %v432, %v548
      %v551 = vmul.f32 %v433, %v548
      %v552 = vmul.f32 %v434, %v548
      %v553 = vmul.f32 %v435, %v548
      %v554 = vmul.f32 %v436, %v548
      %v555 = vmul.f32 %v437, %v548
      %v556 = vmul.f32 %v438, %v548
      %v557 = vadd.f32 %v539, %v549
      %v558 = vadd.f32 %v540, %v550
      %v559 = vadd.f32 %v541, %v551
      %v560 = vadd.f32 %v542, %v552
      %v561 = vadd.f32 %v543, %v553
      %v562 = vadd.f32 %v544, %v554
      %v563 = vadd.f32 %v545, %v555
      %v564 = vadd.f32 %v546, %v556
      %v565 = vld [vmem:[#allocation2 + $0x2] sm:$0xff]
      %v566 = vld [vmem:[#allocation2 + $0x12] sm:$0xff]
      %v567 = vld [vmem:[#allocation2 + $0x22] sm:$0xff]
      %v568 = vld [vmem:[#allocation2 + $0x32] sm:$0xff]
      %v569 = vld [vmem:[#allocation2 + $0x42] sm:$0xff]
      %v570 = vld [vmem:[#allocation2 + $0x52] sm:$0xff]
      %v571 = vld [vmem:[#allocation2 + $0x62] sm:$0xff]
      %v572 = vld [vmem:[#allocation2 + $0x72] sm:$0xff]
      %v573 = vld [vmem:[#allocation2 + $0x82] sm:$0xff]
      %v574 = vld [vmem:[#allocation2 + $0x92] sm:$0xff]
      %v575 = vld [vmem:[#allocation2 + $0xa2] sm:$0xff]
      %v576 = vld [vmem:[#allocation2 + $0xb2] sm:$0xff]
      %v577 = vld [vmem:[#allocation2 + $0xc2] sm:$0xff]
      %v578 = vld [vmem:[#allocation2 + $0xd2] sm:$0xff]
      %v579 = vld [vmem:[%s221 + $0x2] sm:$0x1]
      %v580 = vperm.slane %v579, 0
      %v581 = vmul.f32 %v565, %v580
      %v582 = vmul.f32 %v566, %v580
      %v583 = vmul.f32 %v567, %v580
      %v584 = vmul.f32 %v568, %v580
      %v585 = vmul.f32 %v569, %v580
      %v586 = vmul.f32 %v570, %v580
      %v587 = vmul.f32 %v571, %v580
      %v588 = vmul.f32 %v572, %v580
      %v589 = vadd.f32 %v557, %v581
      %v590 = vadd.f32 %v558, %v582
      %v591 = vadd.f32 %v559, %v583
      %v592 = vadd.f32 %v560, %v584
      %v593 = vadd.f32 %v561, %v585
      %v594 = vadd.f32 %v562, %v586
      %v595 = vadd.f32 %v563, %v587
      %v596 = vadd.f32 %v564, %v588
      %v597 = vld [vmem:[%s221 + $0x9] sm:$0x1]
      %v598 = vperm.slane %v597, 0
      %v599 = vmul.f32 %v566, %v598
      %v600 = vmul.f32 %v567, %v598
      %v601 = vmul.f32 %v568, %v598
      %v602 = vmul.f32 %v569, %v598
      %v603 = vmul.f32 %v570, %v598
      %v604 = vmul.f32 %v571, %v598
      %v605 = vmul.f32 %v572, %v598
      %v606 = vmul.f32 %v573, %v598
      %v607 = vadd.f32 %v589, %v599
      %v608 = vadd.f32 %v590, %v600
      %v609 = vadd.f32 %v591, %v601
      %v610 = vadd.f32 %v592, %v602
      %v611 = vadd.f32 %v593, %v603
      %v612 = vadd.f32 %v594, %v604
      %v613 = vadd.f32 %v595, %v605
      %v614 = vadd.f32 %v596, %v606
      %v615 = vld [vmem:[%s221 + $0x10] sm:$0x1]
      %v616 = vperm.slane %v615, 0
      %v617 = vmul.f32 %v567, %v616
      %v618 = vmul.f32 %v568, %v616
      %v619 = vmul.f32 %v569, %v616
      %v620 = vmul.f32 %v570, %v616
      %v621 = vmul.f32 %v571, %v616
      %v622 = vmul.f32 %v572, %v616
      %v623 = vmul.f32 %v573, %v616
      %v624 = vmul.f32 %v574, %v616
      %v625 = vadd.f32 %v607, %v617
      %v626 = vadd.f32 %v608, %v618
      %v627 = vadd.f32 %v609, %v619
      %v628 = vadd.f32 %v610, %v620
      %v629 = vadd.f32 %v611, %v621
      %v630 = vadd.f32 %v612, %v622
      %v631 = vadd.f32 %v613, %v623
      %v632 = vadd.f32 %v614, %v624
      %v633 = vld [vmem:[%s221 + $0x17] sm:$0x1]
      %v634 = vperm.slane %v633, 0
      %v635 = vmul.f32 %v568, %v634
      %v636 = vmul.f32 %v569, %v634
      %v637 = vmul.f32 %v570, %v634
      %v638 = vmul.f32 %v571, %v634
      %v639 = vmul.f32 %v572, %v634
      %v640 = vmul.f32 %v573, %v634
      %v641 = vmul.f32 %v574, %v634
      %v642 = vmul.f32 %v575, %v634
      %v643 = vadd.f32 %v625, %v635
      %v644 = vadd.f32 %v626, %v636
      %v645 = vadd.f32 %v627, %v637
      %v646 = vadd.f32 %v628, %v638
      %v647 = vadd.f32 %v629, %v639
      %v648 = vadd.f32 %v630, %v640
      %v649 = vadd.f32 %v631, %v641
      %v650 = vadd.f32 %v632, %v642
      %v651 = vld [vmem:[%s221 + $0x1e] sm:$0x1]
      %v652 = vperm.slane %v651, 0
      %v653 = vmul.f32 %v569, %v652
      %v654 = vmul.f32 %v570, %v652
      %v655 = vmul.f32 %v571, %v652
      %v656 = vmul.f32 %v572, %v652
      %v657 = vmul.f32 %v573, %v652
      %v658 = vmul.f32 %v574, %v652
      %v659 = vmul.f32 %v575, %v652
      %v660 = vmul.f32 %v576, %v652
      %v661 = vadd.f32 %v643, %v653
      %v662 = vadd.f32 %v644, %v654
      %v663 = vadd.f32 %v645, %v655
      %v664 = vadd.f32 %v646, %v656
      %v665 = vadd.f32 %v647, %v657
      %v666 = vadd.f32 %v648, %v658
      %v667 = vadd.f32 %v649, %v659
      %v668 = vadd.f32 %v650, %v660
      %v669 = vld [vmem:[%s221 + $0x25] sm:$0x1]
      %v670 = vperm.slane %v669, 0
      %v671 = vmul.f32 %v570, %v670
      %v672 = vmul.f32 %v571, %v670
      %v673 = vmul.f32 %v572, %v670
      %v674 = vmul.f32 %v573, %v670
      %v675 = vmul.f32 %v574, %v670
      %v676 = vmul.f32 %v575, %v670
      %v677 = vmul.f32 %v576, %v670
      %v678 = vmul.f32 %v577, %v670
      %v679 = vadd.f32 %v661, %v671
      %v680 = vadd.f32 %v662, %v672
      %v681 = vadd.f32 %v663, %v673
      %v682 = vadd.f32 %v664, %v674
      %v683 = vadd.f32 %v665, %v675
      %v684 = vadd.f32 %v666, %v676
      %v685 = vadd.f32 %v667, %v677
      %v686 = vadd.f32 %v668, %v678
      %v687 = vld [vmem:[%s221 + $0x2c] sm:$0x1]
      %v688 = vperm.slane %v687, 0
      %v689 = vmul.f32 %v571, %v688
      %v690 = vmul.f32 %v572, %v688
      %v691 = vmul.f32 %v573, %v688
      %v692 = vmul.f32 %v574, %v688
      %v693 = vmul.f32 %v575, %v688
      %v694 = vmul.f32 %v576, %v688
      %v695 = vmul.f32 %v577, %v688
      %v696 = vmul.f32 %v578, %v688
      %v697 = vadd.f32 %v679, %v689
      %v698 = vadd.f32 %v680, %v690
      %v699 = vadd.f32 %v681, %v691
      %v700 = vadd.f32 %v682, %v692
      %v701 = vadd.f32 %v683, %v693
      %v702 = vadd.f32 %v684, %v694
      %v703 = vadd.f32 %v685, %v695
      %v704 = vadd.f32 %v686, %v696
      %v705 = vld [vmem:[#allocation2 + $0x3] sm:$0xff]
      %v706 = vld [vmem:[#allocation2 + $0x13] sm:$0xff]
      %v707 = vld [vmem:[#allocation2 + $0x23] sm:$0xff]
      %v708 = vld [vmem:[#allocation2 + $0x33] sm:$0xff]
      %v709 = vld [vmem:[#allocation2 + $0x43] sm:$0xff]
      %v710 = vld [vmem:[#allocation2 + $0x53] sm:$0xff]
      %v711 = vld [vmem:[#allocation2 + $0x63] sm:$0xff]
      %v712 = vld [vmem:[#allocation2 + $0x73] sm:$0xff]
      %v713 = vld [vmem:[#allocation2 + $0x83] sm:$0xff]
      %v714 = vld [vmem:[#allocation2 + $0x93] sm:$0xff]
      %v715 = vld [vmem:[#allocation2 + $0xa3] sm:$0xff]
      %v716 = vld [vmem:[#allocation2 + $0xb3] sm:$0xff]
      %v717 = vld [vmem:[#allocation2 + $0xc3] sm:$0xff]
      %v718 = vld [vmem:[#allocation2 + $0xd3] sm:$0xff]
      %v719 = vld [vmem:[%s221 + $0x3] sm:$0x1]
      %v720 = vperm.slane %v719, 0
      %v721 = vmul.f32 %v705, %v720
      %v722 = vmul.f32 %v706, %v720
      %v723 = vmul.f32 %v707, %v720
      %v724 = vmul.f32 %v708, %v720
      %v725 = vmul.f32 %v709, %v720
      %v726 = vmul.f32 %v710, %v720
      %v727 = vmul.f32 %v711, %v720
      %v728 = vmul.f32 %v712, %v720
      %v729 = vadd.f32 %v697, %v721
      %v730 = vadd.f32 %v698, %v722
      %v731 = vadd.f32 %v699, %v723
      %v732 = vadd.f32 %v700, %v724
      %v733 = vadd.f32 %v701, %v725
      %v734 = vadd.f32 %v702, %v726
      %v735 = vadd.f32 %v703, %v727
      %v736 = vadd.f32 %v704, %v728
      %v737 = vld [vmem:[%s221 + $0xa] sm:$0x1]
      %v738 = vperm.slane %v737, 0
      %v739 = vmul.f32 %v706, %v738
      %v740 = vmul.f32 %v707, %v738
      %v741 = vmul.f32 %v708, %v738
      %v742 = vmul.f32 %v709, %v738
      %v743 = vmul.f32 %v710, %v738
      %v744 = vmul.f32 %v711, %v738
      %v745 = vmul.f32 %v712, %v738
      %v746 = vmul.f32 %v713, %v738
      %v747 = vadd.f32 %v729, %v739
      %v748 = vadd.f32 %v730, %v740
      %v749 = vadd.f32 %v731, %v741
      %v750 = vadd.f32 %v732, %v742
      %v751 = vadd.f32 %v733, %v743
      %v752 = vadd.f32 %v734, %v744
      %v753 = vadd.f32 %v735, %v745
      %v754 = vadd.f32 %v736, %v746
      %v755 = vld [vmem:[%s221 + $0x11] sm:$0x1]
      %v756 = vperm.slane %v755, 0
      %v757 = vmul.f32 %v707, %v756
      %v758 = vmul.f32 %v708, %v756
      %v759 = vmul.f32 %v709, %v756
      %v760 = vmul.f32 %v710, %v756
      %v761 = vmul.f32 %v711, %v756
      %v762 = vmul.f32 %v712, %v756
      %v763 = vmul.f32 %v713, %v756
      %v764 = vmul.f32 %v714, %v756
      %v765 = vadd.f32 %v747, %v757
      %v766 = vadd.f32 %v748, %v758
      %v767 = vadd.f32 %v749, %v759
      %v768 = vadd.f32 %v750, %v760
      %v769 = vadd.f32 %v751, %v761
      %v770 = vadd.f32 %v752, %v762
      %v771 = vadd.f32 %v753, %v763
      %v772 = vadd.f32 %v754, %v764
      %v773 = vld [vmem:[%s221 + $0x18] sm:$0x1]
      %v774 = vperm.slane %v773, 0
      %v775 = vmul.f32 %v708, %v774
      %v776 = vmul.f32 %v709, %v774
      %v777 = vmul.f32 %v710, %v774
      %v778 = vmul.f32 %v711, %v774
      %v779 = vmul.f32 %v712, %v774
      %v780 = vmul.f32 %v713, %v774
      %v781 = vmul.f32 %v714, %v774
      %v782 = vmul.f32 %v715, %v774
      %v783 = vadd.f32 %v765, %v775
      %v784 = vadd.f32 %v766, %v776
      %v785 = vadd.f32 %v767, %v777
      %v786 = vadd.f32 %v768, %v778
      %v787 = vadd.f32 %v769, %v779
      %v788 = vadd.f32 %v770, %v780
      %v789 = vadd.f32 %v771, %v781
      %v790 = vadd.f32 %v772, %v782
      %v791 = vld [vmem:[%s221 + $0x1f] sm:$0x1]
      %v792 = vperm.slane %v791, 0
      %v793 = vmul.f32 %v709, %v792
      %v794 = vmul.f32 %v710, %v792
      %v795 = vmul.f32 %v711, %v792
      %v796 = vmul.f32 %v712, %v792
      %v797 = vmul.f32 %v713, %v792
      %v798 = vmul.f32 %v714, %v792
      %v799 = vmul.f32 %v715, %v792
      %v800 = vmul.f32 %v716, %v792
      %v801 = vadd.f32 %v783, %v793
      %v802 = vadd.f32 %v784, %v794
      %v803 = vadd.f32 %v785, %v795
      %v804 = vadd.f32 %v786, %v796
      %v805 = vadd.f32 %v787, %v797
      %v806 = vadd.f32 %v788, %v798
      %v807 = vadd.f32 %v789, %v799
      %v808 = vadd.f32 %v790, %v800
      %v809 = vld [vmem:[%s221 + $0x26] sm:$0x1]
      %v810 = vperm.slane %v809, 0
      %v811 = vmul.f32 %v710, %v810
      %v812 = vmul.f32 %v711, %v810
      %v813 = vmul.f32 %v712, %v810
      %v814 = vmul.f32 %v713, %v810
      %v815 = vmul.f32 %v714, %v810
      %v816 = vmul.f32 %v715, %v810
      %v817 = vmul.f32 %v716, %v810
      %v818 = vmul.f32 %v717, %v810
      %v819 = vadd.f32 %v801, %v811
      %v820 = vadd.f32 %v802, %v812
      %v821 = vadd.f32 %v803, %v813
      %v822 = vadd.f32 %v804, %v814
      %v823 = vadd.f32 %v805, %v815
      %v824 = vadd.f32 %v806, %v816
      %v825 = vadd.f32 %v807, %v817
      %v826 = vadd.f32 %v808, %v818
      %v827 = vld [vmem:[%s221 + $0x2d] sm:$0x1]
      %v828 = vperm.slane %v827, 0
      %v829 = vmul.f32 %v711, %v828
      %v830 = vmul.f32 %v712, %v828
      %v831 = vmul.f32 %v713, %v828
      %v832 = vmul.f32 %v714, %v828
      %v833 = vmul.f32 %v715, %v828
      %v834 = vmul.f32 %v716, %v828
      %v835 = vmul.f32 %v717, %v828
      %v836 = vmul.f32 %v718, %v828
      %v837 = vadd.f32 %v819, %v829
      %v838 = vadd.f32 %v820, %v830
      %v839 = vadd.f32 %v821, %v831
      %v840 = vadd.f32 %v822, %v832
      %v841 = vadd.f32 %v823, %v833
      %v842 = vadd.f32 %v824, %v834
      %v843 = vadd.f32 %v825, %v835
      %v844 = vadd.f32 %v826, %v836
      %v845 = vld [vmem:[#allocation2 + $0x4] sm:$0xff]
      %v846 = vld [vmem:[#allocation2 + $0x14] sm:$0xff]
      %v847 = vld [vmem:[#allocation2 + $0x24] sm:$0xff]
      %v848 = vld [vmem:[#allocation2 + $0x34] sm:$0xff]
      %v849 = vld [vmem:[#allocation2 + $0x44] sm:$0xff]
      %v850 = vld [vmem:[#allocation2 + $0x54] sm:$0xff]
      %v851 = vld [vmem:[#allocation2 + $0x64] sm:$0xff]
      %v852 = vld [vmem:[#allocation2 + $0x74] sm:$0xff]
      %v853 = vld [vmem:[#allocation2 + $0x84] sm:$0xff]
      %v854 = vld [vmem:[#allocation2 + $0x94] sm:$0xff]
      %v855 = vld [vmem:[#allocation2 + $0xa4] sm:$0xff]
      %v856 = vld [vmem:[#allocation2 + $0xb4] sm:$0xff]
      %v857 = vld [vmem:[#allocation2 + $0xc4] sm:$0xff]
      %v858 = vld [vmem:[#allocation2 + $0xd4] sm:$0xff]
      %v859 = vld [vmem:[%s221 + $0x4] sm:$0x1]
      %v860 = vperm.slane %v859, 0
      %v861 = vmul.f32 %v845, %v860
      %v862 = vmul.f32 %v846, %v860
      %v863 = vmul.f32 %v847, %v860
      %v864 = vmul.f32 %v848, %v860
      %v865 = vmul.f32 %v849, %v860
      %v866 = vmul.f32 %v850, %v860
      %v867 = vmul.f32 %v851, %v860
      %v868 = vmul.f32 %v852, %v860
      %v869 = vadd.f32 %v837, %v861
      %v870 = vadd.f32 %v838, %v862
      %v871 = vadd.f32 %v839, %v863
      %v872 = vadd.f32 %v840, %v864
      %v873 = vadd.f32 %v841, %v865
      %v874 = vadd.f32 %v842, %v866
      %v875 = vadd.f32 %v843, %v867
      %v876 = vadd.f32 %v844, %v868
      %v877 = vld [vmem:[%s221 + $0xb] sm:$0x1]
      %v878 = vperm.slane %v877, 0
      %v879 = vmul.f32 %v846, %v878
      %v880 = vmul.f32 %v847, %v878
      %v881 = vmul.f32 %v848, %v878
      %v882 = vmul.f32 %v849, %v878
      %v883 = vmul.f32 %v850, %v878
      %v884 = vmul.f32 %v851, %v878
      %v885 = vmul.f32 %v852, %v878
      %v886 = vmul.f32 %v853, %v878
      %v887 = vadd.f32 %v869, %v879
      %v888 = vadd.f32 %v870, %v880
      %v889 = vadd.f32 %v871, %v881
      %v890 = vadd.f32 %v872, %v882
      %v891 = vadd.f32 %v873, %v883
      %v892 = vadd.f32 %v874, %v884
      %v893 = vadd.f32 %v875, %v885
      %v894 = vadd.f32 %v876, %v886
      %v895 = vld [vmem:[%s221 + $0x12] sm:$0x1]
      %v896 = vperm.slane %v895, 0
      %v897 = vmul.f32 %v847, %v896
      %v898 = vmul.f32 %v848, %v896
      %v899 = vmul.f32 %v849, %v896
      %v900 = vmul.f32 %v850, %v896
      %v901 = vmul.f32 %v851, %v896
      %v902 = vmul.f32 %v852, %v896
      %v903 = vmul.f32 %v853, %v896
      %v904 = vmul.f32 %v854, %v896
      %v905 = vadd.f32 %v887, %v897
      %v906 = vadd.f32 %v888, %v898
      %v907 = vadd.f32 %v889, %v899
      %v908 = vadd.f32 %v890, %v900
      %v909 = vadd.f32 %v891, %v901
      %v910 = vadd.f32 %v892, %v902
      %v911 = vadd.f32 %v893, %v903
      %v912 = vadd.f32 %v894, %v904
      %v913 = vld [vmem:[%s221 + $0x19] sm:$0x1]
      %v914 = vperm.slane %v913, 0
      %v915 = vmul.f32 %v848, %v914
      %v916 = vmul.f32 %v849, %v914
      %v917 = vmul.f32 %v850, %v914
      %v918 = vmul.f32 %v851, %v914
      %v919 = vmul.f32 %v852, %v914
      %v920 = vmul.f32 %v853, %v914
      %v921 = vmul.f32 %v854, %v914
      %v922 = vmul.f32 %v855, %v914
      %v923 = vadd.f32 %v905, %v915
      %v924 = vadd.f32 %v906, %v916
      %v925 = vadd.f32 %v907, %v917
      %v926 = vadd.f32 %v908, %v918
      %v927 = vadd.f32 %v909, %v919
      %v928 = vadd.f32 %v910, %v920
      %v929 = vadd.f32 %v911, %v921
      %v930 = vadd.f32 %v912, %v922
      %v931 = vld [vmem:[%s221 + $0x20] sm:$0x1]
      %v932 = vperm.slane %v931, 0
      %v933 = vmul.f32 %v849, %v932
      %v934 = vmul.f32 %v850, %v932
      %v935 = vmul.f32 %v851, %v932
      %v936 = vmul.f32 %v852, %v932
      %v937 = vmul.f32 %v853, %v932
      %v938 = vmul.f32 %v854, %v932
      %v939 = vmul.f32 %v855, %v932
      %v940 = vmul.f32 %v856, %v932
      %v941 = vadd.f32 %v923, %v933
      %v942 = vadd.f32 %v924, %v934
      %v943 = vadd.f32 %v925, %v935
      %v944 = vadd.f32 %v926, %v936
      %v945 = vadd.f32 %v927, %v937
      %v946 = vadd.f32 %v928, %v938
      %v947 = vadd.f32 %v929, %v939
      %v948 = vadd.f32 %v930, %v940
      %v949 = vld [vmem:[%s221 + $0x27] sm:$0x1]
      %v950 = vperm.slane %v949, 0
      %v951 = vmul.f32 %v850, %v950
      %v952 = vmul.f32 %v851, %v950
      %v953 = vmul.f32 %v852, %v950
      %v954 = vmul.f32 %v853, %v950
      %v955 = vmul.f32 %v854, %v950
      %v956 = vmul.f32 %v855, %v950
      %v957 = vmul.f32 %v856, %v950
      %v958 = vmul.f32 %v857, %v950
      %v959 = vadd.f32 %v941, %v951
      %v960 = vadd.f32 %v942, %v952
      %v961 = vadd.f32 %v943, %v953
      %v962 = vadd.f32 %v944, %v954
      %v963 = vadd.f32 %v945, %v955
      %v964 = vadd.f32 %v946, %v956
      %v965 = vadd.f32 %v947, %v957
      %v966 = vadd.f32 %v948, %v958
      %v967 = vld [vmem:[%s221 + $0x2e] sm:$0x1]
      %v968 = vperm.slane %v967, 0
      %v969 = vmul.f32 %v851, %v968
      %v970 = vmul.f32 %v852, %v968
      %v971 = vmul.f32 %v853, %v968
      %v972 = vmul.f32 %v854, %v968
      %v973 = vmul.f32 %v855, %v968
      %v974 = vmul.f32 %v856, %v968
      %v975 = vmul.f32 %v857, %v968
      %v976 = vmul.f32 %v858, %v968
      %v977 = vadd.f32 %v959, %v969
      %v978 = vadd.f32 %v960, %v970
      %v979 = vadd.f32 %v961, %v971
      %v980 = vadd.f32 %v962, %v972
      %v981 = vadd.f32 %v963, %v973
      %v982 = vadd.f32 %v964, %v974
      %v983 = vadd.f32 %v965, %v975
      %v984 = vadd.f32 %v966, %v976
      %v985 = vld [vmem:[#allocation2 + $0x5] sm:$0xff]
      %v986 = vld [vmem:[#allocation2 + $0x15] sm:$0xff]
      %v987 = vld [vmem:[#allocation2 + $0x25] sm:$0xff]
      %v988 = vld [vmem:[#allocation2 + $0x35] sm:$0xff]
      %v989 = vld [vmem:[#allocation2 + $0x45] sm:$0xff]
      %v990 = vld [vmem:[#allocation2 + $0x55] sm:$0xff]
      %v991 = vld [vmem:[#allocation2 + $0x65] sm:$0xff]
      %v992 = vld [vmem:[#allocation2 + $0x75] sm:$0xff]
      %v993 = vld [vmem:[#allocation2 + $0x85] sm:$0xff]
      %v994 = vld [vmem:[#allocation2 + $0x95] sm:$0xff]
      %v995 = vld [vmem:[#allocation2 + $0xa5] sm:$0xff]
      %v996 = vld [vmem:[#allocation2 + $0xb5] sm:$0xff]
      %v997 = vld [vmem:[#allocation2 + $0xc5] sm:$0xff]
      %v998 = vld [vmem:[#allocation2 + $0xd5] sm:$0xff]
      %v999 = vld [vmem:[%s221 + $0x5] sm:$0x1]
      %v1000 = vperm.slane %v999, 0
      %v1001 = vmul.f32 %v985, %v1000
      %v1002 = vmul.f32 %v986, %v1000
      %v1003 = vmul.f32 %v987, %v1000
      %v1004 = vmul.f32 %v988, %v1000
      %v1005 = vmul.f32 %v989, %v1000
      %v1006 = vmul.f32 %v990, %v1000
      %v1007 = vmul.f32 %v991, %v1000
      %v1008 = vmul.f32 %v992, %v1000
      %v1009 = vadd.f32 %v977, %v1001
      %v1010 = vadd.f32 %v978, %v1002
      %v1011 = vadd.f32 %v979, %v1003
      %v1012 = vadd.f32 %v980, %v1004
      %v1013 = vadd.f32 %v981, %v1005
      %v1014 = vadd.f32 %v982, %v1006
      %v1015 = vadd.f32 %v983, %v1007
      %v1016 = vadd.f32 %v984, %v1008
      %v1017 = vld [vmem:[%s221 + $0xc] sm:$0x1]
      %v1018 = vperm.slane %v1017, 0
      %v1019 = vmul.f32 %v986, %v1018
      %v1020 = vmul.f32 %v987, %v1018
      %v1021 = vmul.f32 %v988, %v1018
      %v1022 = vmul.f32 %v989, %v1018
      %v1023 = vmul.f32 %v990, %v1018
      %v1024 = vmul.f32 %v991, %v1018
      %v1025 = vmul.f32 %v992, %v1018
      %v1026 = vmul.f32 %v993, %v1018
      %v1027 = vadd.f32 %v1009, %v1019
      %v1028 = vadd.f32 %v1010, %v1020
      %v1029 = vadd.f32 %v1011, %v1021
      %v1030 = vadd.f32 %v1012, %v1022
      %v1031 = vadd.f32 %v1013, %v1023
      %v1032 = vadd.f32 %v1014, %v1024
      %v1033 = vadd.f32 %v1015, %v1025
      %v1034 = vadd.f32 %v1016, %v1026
      %v1035 = vld [vmem:[%s221 + $0x13] sm:$0x1]
      %v1036 = vperm.slane %v1035, 0
      %v1037 = vmul.f32 %v987, %v1036
      %v1038 = vmul.f32 %v988, %v1036
      %v1039 = vmul.f32 %v989, %v1036
      %v1040 = vmul.f32 %v990, %v1036
      %v1041 = vmul.f32 %v991, %v1036
      %v1042 = vmul.f32 %v992, %v1036
      %v1043 = vmul.f32 %v993, %v1036
      %v1044 = vmul.f32 %v994, %v1036
      %v1045 = vadd.f32 %v1027, %v1037
      %v1046 = vadd.f32 %v1028, %v1038
      %v1047 = vadd.f32 %v1029, %v1039
      %v1048 = vadd.f32 %v1030, %v1040
      %v1049 = vadd.f32 %v1031, %v1041
      %v1050 = vadd.f32 %v1032, %v1042
      %v1051 = vadd.f32 %v1033, %v1043
      %v1052 = vadd.f32 %v1034, %v1044
      %v1053 = vld [vmem:[%s221 + $0x1a] sm:$0x1]
      %v1054 = vperm.slane %v1053, 0
      %v1055 = vmul.f32 %v988, %v1054
      %v1056 = vmul.f32 %v989, %v1054
      %v1057 = vmul.f32 %v990, %v1054
      %v1058 = vmul.f32 %v991, %v1054
      %v1059 = vmul.f32 %v992, %v1054
      %v1060 = vmul.f32 %v993, %v1054
      %v1061 = vmul.f32 %v994, %v1054
      %v1062 = vmul.f32 %v995, %v1054
      %v1063 = vadd.f32 %v1045, %v1055
      %v1064 = vadd.f32 %v1046, %v1056
      %v1065 = vadd.f32 %v1047, %v1057
      %v1066 = vadd.f32 %v1048, %v1058
      %v1067 = vadd.f32 %v1049, %v1059
      %v1068 = vadd.f32 %v1050, %v1060
      %v1069 = vadd.f32 %v1051, %v1061
      %v1070 = vadd.f32 %v1052, %v1062
      %v1071 = vld [vmem:[%s221 + $0x21] sm:$0x1]
      %v1072 = vperm.slane %v1071, 0
      %v1073 = vmul.f32 %v989, %v1072
      %v1074 = vmul.f32 %v990, %v1072
      %v1075 = vmul.f32 %v991, %v1072
      %v1076 = vmul.f32 %v992, %v1072
      %v1077 = vmul.f32 %v993, %v1072
      %v1078 = vmul.f32 %v994, %v1072
      %v1079 = vmul.f32 %v995, %v1072
      %v1080 = vmul.f32 %v996, %v1072
      %v1081 = vadd.f32 %v1063, %v1073
      %v1082 = vadd.f32 %v1064, %v1074
      %v1083 = vadd.f32 %v1065, %v1075
      %v1084 = vadd.f32 %v1066, %v1076
      %v1085 = vadd.f32 %v1067, %v1077
      %v1086 = vadd.f32 %v1068, %v1078
      %v1087 = vadd.f32 %v1069, %v1079
      %v1088 = vadd.f32 %v1070, %v1080
      %v1089 = vld [vmem:[%s221 + $0x28] sm:$0x1]
      %v1090 = vperm.slane %v1089, 0
      %v1091 = vmul.f32 %v990, %v1090
      %v1092 = vmul.f32 %v991, %v1090
      %v1093 = vmul.f32 %v992, %v1090
      %v1094 = vmul.f32 %v993, %v1090
      %v1095 = vmul.f32 %v994, %v1090
      %v1096 = vmul.f32 %v995, %v1090
      %v1097 = vmul.f32 %v996, %v1090
      %v1098 = vmul.f32 %v997, %v1090
      %v1099 = vadd.f32 %v1081, %v1091
      %v1100 = vadd.f32 %v1082, %v1092
      %v1101 = vadd.f32 %v1083, %v1093
      %v1102 = vadd.f32 %v1084, %v1094
      %v1103 = vadd.f32 %v1085, %v1095
      %v1104 = vadd.f32 %v1086, %v1096
      %v1105 = vadd.f32 %v1087, %v1097
      %v1106 = vadd.f32 %v1088, %v1098
      %v1107 = vld [vmem:[%s221 + $0x2f] sm:$0x1]
      %v1108 = vperm.slane %v1107, 0
      %v1109 = vmul.f32 %v991, %v1108
      %v1110 = vmul.f32 %v992, %v1108
      %v1111 = vmul.f32 %v993, %v1108
      %v1112 = vmul.f32 %v994, %v1108
      %v1113 = vmul.f32 %v995, %v1108
      %v1114 = vmul.f32 %v996, %v1108
      %v1115 = vmul.f32 %v997, %v1108
      %v1116 = vmul.f32 %v998, %v1108
      %v1117 = vadd.f32 %v1099, %v1109
      %v1118 = vadd.f32 %v1100, %v1110
      %v1119 = vadd.f32 %v1101, %v1111
      %v1120 = vadd.f32 %v1102, %v1112
      %v1121 = vadd.f32 %v1103, %v1113
      %v1122 = vadd.f32 %v1104, %v1114
      %v1123 = vadd.f32 %v1105, %v1115
      %v1124 = vadd.f32 %v1106, %v1116
      %v1125 = vld [vmem:[#allocation2 + $0x6] sm:$0xff]
      %v1126 = vld [vmem:[#allocation2 + $0x16] sm:$0xff]
      %v1127 = vld [vmem:[#allocation2 + $0x26] sm:$0xff]
      %v1128 = vld [vmem:[#allocation2 + $0x36] sm:$0xff]
      %v1129 = vld [vmem:[#allocation2 + $0x46] sm:$0xff]
      %v1130 = vld [vmem:[#allocation2 + $0x56] sm:$0xff]
      %v1131 = vld [vmem:[#allocation2 + $0x66] sm:$0xff]
      %v1132 = vld [vmem:[#allocation2 + $0x76] sm:$0xff]
      %v1133 = vld [vmem:[#allocation2 + $0x86] sm:$0xff]
      %v1134 = vld [vmem:[#allocation2 + $0x96] sm:$0xff]
      %v1135 = vld [vmem:[#allocation2 + $0xa6] sm:$0xff]
      %v1136 = vld [vmem:[#allocation2 + $0xb6] sm:$0xff]
      %v1137 = vld [vmem:[#allocation2 + $0xc6] sm:$0xff]
      %v1138 = vld [vmem:[#allocation2 + $0xd6] sm:$0xff]
      %v1139 = vld [vmem:[%s221 + $0x6] sm:$0x1]
      %v1140 = vperm.slane %v1139, 0
      %v1141 = vmul.f32 %v1125, %v1140
      %v1142 = vmul.f32 %v1126, %v1140
      %v1143 = vmul.f32 %v1127, %v1140
      %v1144 = vmul.f32 %v1128, %v1140
      %v1145 = vmul.f32 %v1129, %v1140
      %v1146 = vmul.f32 %v1130, %v1140
      %v1147 = vmul.f32 %v1131, %v1140
      %v1148 = vmul.f32 %v1132, %v1140
      %v1149 = vadd.f32 %v1117, %v1141
      %v1150 = vadd.f32 %v1118, %v1142
      %v1151 = vadd.f32 %v1119, %v1143
      %v1152 = vadd.f32 %v1120, %v1144
      %v1153 = vadd.f32 %v1121, %v1145
      %v1154 = vadd.f32 %v1122, %v1146
      %v1155 = vadd.f32 %v1123, %v1147
      %v1156 = vadd.f32 %v1124, %v1148
      %v1157 = vld [vmem:[%s221 + $0xd] sm:$0x1]
      %v1158 = vperm.slane %v1157, 0
      %v1159 = vmul.f32 %v1126, %v1158
      %v1160 = vmul.f32 %v1127, %v1158
      %v1161 = vmul.f32 %v1128, %v1158
      %v1162 = vmul.f32 %v1129, %v1158
      %v1163 = vmul.f32 %v1130, %v1158
      %v1164 = vmul.f32 %v1131, %v1158
      %v1165 = vmul.f32 %v1132, %v1158
      %v1166 = vmul.f32 %v1133, %v1158
      %v1167 = vadd.f32 %v1149, %v1159
      %v1168 = vadd.f32 %v1150, %v1160
      %v1169 = vadd.f32 %v1151, %v1161
      %v1170 = vadd.f32 %v1152, %v1162
      %v1171 = vadd.f32 %v1153, %v1163
      %v1172 = vadd.f32 %v1154, %v1164
      %v1173 = vadd.f32 %v1155, %v1165
      %v1174 = vadd.f32 %v1156, %v1166
      %v1175 = vld [vmem:[%s221 + $0x14] sm:$0x1]
      %v1176 = vperm.slane %v1175, 0
      %v1177 = vmul.f32 %v1127, %v1176
      %v1178 = vmul.f32 %v1128, %v1176
      %v1179 = vmul.f32 %v1129, %v1176
      %v1180 = vmul.f32 %v1130, %v1176
      %v1181 = vmul.f32 %v1131, %v1176
      %v1182 = vmul.f32 %v1132, %v1176
      %v1183 = vmul.f32 %v1133, %v1176
      %v1184 = vmul.f32 %v1134, %v1176
      %v1185 = vadd.f32 %v1167, %v1177
      %v1186 = vadd.f32 %v1168, %v1178
      %v1187 = vadd.f32 %v1169, %v1179
      %v1188 = vadd.f32 %v1170, %v1180
      %v1189 = vadd.f32 %v1171, %v1181
      %v1190 = vadd.f32 %v1172, %v1182
      %v1191 = vadd.f32 %v1173, %v1183
      %v1192 = vadd.f32 %v1174, %v1184
      %v1193 = vld [vmem:[%s221 + $0x1b] sm:$0x1]
      %v1194 = vperm.slane %v1193, 0
      %v1195 = vmul.f32 %v1128, %v1194
      %v1196 = vmul.f32 %v1129, %v1194
      %v1197 = vmul.f32 %v1130, %v1194
      %v1198 = vmul.f32 %v1131, %v1194
      %v1199 = vmul.f32 %v1132, %v1194
      %v1200 = vmul.f32 %v1133, %v1194
      %v1201 = vmul.f32 %v1134, %v1194
      %v1202 = vmul.f32 %v1135, %v1194
      %v1203 = vadd.f32 %v1185, %v1195
      %v1204 = vadd.f32 %v1186, %v1196
      %v1205 = vadd.f32 %v1187, %v1197
      %v1206 = vadd.f32 %v1188, %v1198
      %v1207 = vadd.f32 %v1189, %v1199
      %v1208 = vadd.f32 %v1190, %v1200
      %v1209 = vadd.f32 %v1191, %v1201
      %v1210 = vadd.f32 %v1192, %v1202
      %v1211 = vld [vmem:[%s221 + $0x22] sm:$0x1]
      %v1212 = vperm.slane %v1211, 0
      %v1213 = vmul.f32 %v1129, %v1212
      %v1214 = vmul.f32 %v1130, %v1212
      %v1215 = vmul.f32 %v1131, %v1212
      %v1216 = vmul.f32 %v1132, %v1212
      %v1217 = vmul.f32 %v1133, %v1212
      %v1218 = vmul.f32 %v1134, %v1212
      %v1219 = vmul.f32 %v1135, %v1212
      %v1220 = vmul.f32 %v1136, %v1212
      %v1221 = vadd.f32 %v1203, %v1213
      %v1222 = vadd.f32 %v1204, %v1214
      %v1223 = vadd.f32 %v1205, %v1215
      %v1224 = vadd.f32 %v1206, %v1216
      %v1225 = vadd.f32 %v1207, %v1217
      %v1226 = vadd.f32 %v1208, %v1218
      %v1227 = vadd.f32 %v1209, %v1219
      %v1228 = vadd.f32 %v1210, %v1220
      %v1229 = vld [vmem:[%s221 + $0x29] sm:$0x1]
      %v1230 = vperm.slane %v1229, 0
      %v1231 = vmul.f32 %v1130, %v1230
      %v1232 = vmul.f32 %v1131, %v1230
      %v1233 = vmul.f32 %v1132, %v1230
      %v1234 = vmul.f32 %v1133, %v1230
      %v1235 = vmul.f32 %v1134, %v1230
      %v1236 = vmul.f32 %v1135, %v1230
      %v1237 = vmul.f32 %v1136, %v1230
      %v1238 = vmul.f32 %v1137, %v1230
      %v1239 = vadd.f32 %v1221, %v1231
      %v1240 = vadd.f32 %v1222, %v1232
      %v1241 = vadd.f32 %v1223, %v1233
      %v1242 = vadd.f32 %v1224, %v1234
      %v1243 = vadd.f32 %v1225, %v1235
      %v1244 = vadd.f32 %v1226, %v1236
      %v1245 = vadd.f32 %v1227, %v1237
      %v1246 = vadd.f32 %v1228, %v1238
      %v1247 = vld [vmem:[%s221 + $0x30] sm:$0x1]
      %v1248 = vperm.slane %v1247, 0
      %v1249 = vmul.f32 %v1131, %v1248
      %v1250 = vmul.f32 %v1132, %v1248
      %v1251 = vmul.f32 %v1133, %v1248
      %v1252 = vmul.f32 %v1134, %v1248
      %v1253 = vmul.f32 %v1135, %v1248
      %v1254 = vmul.f32 %v1136, %v1248
      %v1255 = vmul.f32 %v1137, %v1248
      %v1256 = vmul.f32 %v1138, %v1248
      %v1257 = vadd.f32 %v1239, %v1249
      %v1258 = vadd.f32 %v1240, %v1250
      %v1259 = vadd.f32 %v1241, %v1251
      %v1260 = vadd.f32 %v1242, %v1252
      %v1261 = vadd.f32 %v1243, %v1253
      %v1262 = vadd.f32 %v1244, %v1254
      %v1263 = vadd.f32 %v1245, %v1255
      %v1264 = vadd.f32 %v1246, %v1256
      %1265 = vst [vmem:[%s232 + $0x1] sm:$0xff] %v1257
      %1266 = vst [vmem:[%s232 + $0x9] sm:$0xff] %v1258
      %1267 = vst [vmem:[%s232 + $0x11] sm:$0xff] %v1259
      %1268 = vst [vmem:[%s232 + $0x19] sm:$0xff] %v1260
      %1269 = vst [vmem:[%s232 + $0x21] sm:$0xff] %v1261
      %1270 = vst [vmem:[%s232 + $0x29] sm:$0xff] %v1262
      %1271 = vst [vmem:[%s232 + $0x31] sm:$0xff] %v1263
      %1272 = vst [vmem:[%s232 + $0x39] sm:$0xff] %v1264
      %p1273 = scmp.lt.s32.totalorder %s19, 1
      %s1274 = scalar_select %p1273, %s19, 1
      %p1275 = scmp.lt.s32.totalorder %s18, 0
      %s1276 = scalar_select %p1275, %s18, 0
      %s1277 = smul.addr %s1274, 9
      %s1278 = sadd.s32 %s1276, %s1277
      %s1279 = smul.addr %s1278, 8
      %s1280 = scalar_lea.vmem %s3, %s1279
      // Predicated region
      $region33: #{tpu_custom_call.1} parent=31 // pred_check
        %p1281 = pneg %p126
      $region34: #{tpu_custom_call.1} parent=31 // pred_check_branch
        %1283 = sbr.rel (%p1281) target = $region36
      $region35: #{tpu_custom_call.1} parent=31 // pred_region
        _
      $region36: #{tpu_custom_call.1} parent=31 // pred_fallthru
        _
    $region32: #{tpu_custom_call.1} parent=5 // pred_fallthru
      _
    %p1284 = scmp.le.s32.totalorder 2, %s9
    // Predicated region
    $region37: #{tpu_custom_call.1} parent=5 // pred_check
      %p1285 = pneg %p1284
    $region38: #{tpu_custom_call.1} parent=5 // pred_check_branch
      %1287 = sbr.rel (%p1285) target = $region40
    $region39: #{tpu_custom_call.1} parent=5 // pred_region
      %s1288 = ssub.s32 %s9, 2
      // Predicated region
      $region41: #{tpu_custom_call.1} parent=39 // pred_check
        %p1289 = pneg %p132
      $region42: #{tpu_custom_call.1} parent=39 // pred_check_branch
        %1291 = sbr.rel (%p1289) target = $region44
      $region43: #{tpu_custom_call.1} parent=39 // pred_region
        %p1292 = scmp.lt.s32.totalorder %s21, 1
        %s1293 = scalar_select %p1292, %s21, 1
        %p1294 = scmp.lt.s32.totalorder %s20, 0
        %s1295 = scalar_select %p1294, %s20, 0
        %s1296 = smul.addr %s1293, 9
        %s1297 = sadd.s32 %s1295, %s1296
        %s1298 = smul.addr %s1297, 8
        %s1299 = scalar_lea.vmem %s3, %s1298
      $region44: #{tpu_custom_call.1} parent=39 // pred_fallthru
        _
    $region40: #{tpu_custom_call.1} parent=5 // pred_fallthru
      _
  $region6: #{tpu_custom_call.1} parent=0 // loop_footer
    %s13 = sadd.s32 1, %s9
  $region7: #{tpu_custom_call.1} parent=0 // loop_footer_branch
    %8 = sbr.rel target = $region3
  $region8: #{tpu_custom_call.1} parent=0 // loop_exit
    _

</llo_original>
